<compile_context>
chip_gen: v6e
topology: v6e:2x2x1
jax: 0.10.0
libtpu: 0.0.40
codegen_flags: <defaults>
</compile_context>

<pallas_src>
import functools

import jax
import jax.numpy as jnp
from jax import lax
from jax.experimental import pallas as pl
from jax.experimental.pallas import tpu as pltpu


def _default_split_proj():
    """v5e's MXU is 4x128^2: a fused K=2H=256 contraction is two 128-deep passes
    anyway, so the lane-dim concat only adds a VMEM copy there.  v6e/v7x keep
    the fused form (K=256 exactly fills the 256-wide MXU)."""
    try:
        kind = jax.devices()[0].device_kind.lower()
    except Exception:
        return False
    return ("v5 lite" in kind) or ("v5e" in kind) or ("v5litepod" in kind)


# ----------------------------------------------------------------------------
# Fused kernel: embeddings -> encoder -> enc_state -> plan decoder -> decoder
# ----------------------------------------------------------------------------
def _fused_nmt_plan_kernel(src_ids_ref, tgt_ids_ref, plan_ids_ref, lens_ref,
                           src_tab_ref, tgt_tab_ref, plan_tab_ref,
                           w_enc_ref, b_enc_ref,
                           w_dec_ref, b_dec_ref,
                           w_plan_ref, b_plan_ref,
                           dec_out_ref, dec_attn_ref,
                           plan_out_ref, plan_attn_ref,
                           *, split_proj):
    f32, bf16 = jnp.float32, jnp.bfloat16
    bt, S, _ = src_ids_ref.shape
    H = w_enc_ref.shape[0]

    def embed2d(ids_ref, tab_ref):
        # Embedding gather on the MXU: one-hot(ids) @ table (exact for a 0/1
        # selector with f32 accumulation).  Keeps the gather inside the kernel.
        # TODO(synk): production vocab -> scalar-prefetch DMA row gather.
        b_, L_, _ = ids_ref.shape
        V = tab_ref.shape[0]
        ids = ids_ref[...].reshape(b_ * L_, 1)                       # int32
        vocab_pos = lax.broadcasted_iota(jnp.int32, (b_ * L_, V), 1)
        onehot = (vocab_pos == ids).astype(bf16)                     # (b*L, V)
        return jnp.dot(onehot, tab_ref[...],
                       preferred_element_type=f32)                   # (b*L, H)

    # ---- encoder: memory_bank = tanh(embed(src) @ W_enc + b_enc) ----
    src_emb = embed2d(src_ids_ref, src_tab_ref)                      # (bt*S, H) f32
    mem2d = jnp.tanh(
        jnp.dot(src_emb.astype(bf16), w_enc_ref[...],
                preferred_element_type=f32) + b_enc_ref[...])
    # Only the bf16 copy of the memory bank stays live for the rest of the
    # kernel (review item: halve the memory-bank footprint).
    mem_bf = mem2d.astype(bf16).reshape(bt, S, H)

    # ---- enc_state: length-masked mean of the memory bank, on the MXU ----
    lens_i = lens_ref[...]                                           # (bt,1,1) i32
    pos_s = lax.broadcasted_iota(jnp.int32, (bt, 1, S), 2)
    src_mask = (pos_s < lens_i).astype(bf16)                         # (bt,1,S)
    sum_mem = lax.dot_general(
        src_mask, mem_bf,
        dimension_numbers=(((2,), (1,)), ((0,), (0,))),
        preferred_element_type=f32)                                  # (bt,1,H)
    inv_len = 1.0 / jnp.maximum(lens_i.astype(f32), 1.0)             # zero-len safe
    enc_state = sum_mem * inv_len                                    # (bt,1,H) f32

    def attn_decoder(ids_ref, tab_ref, w_ref, b_ref, out_ref, attn_ref):
        L = ids_ref.shape[1]
        q = embed2d(ids_ref, tab_ref).reshape(bt, L, H) + enc_state  # f32
        q_bf = q.astype(bf16)
        # scores = q @ mem^T, batched over bt, contracting H directly (no
        # transposed memory-bank tile materialized).
        # TODO(synk): flash-style streaming over S for production src lengths.
        scores = lax.dot_general(
            q_bf, mem_bf,
            dimension_numbers=(((2,), (2,)), ((0,), (0,))),
            preferred_element_type=f32)                              # (bt,L,S)
        pos = lax.broadcasted_iota(jnp.int32, (bt, L, S), 2)
        scores = jnp.where(pos < lens_i, scores, jnp.float32(-1e9))
        smax = jnp.max(scores, axis=-1, keepdims=True)
        p = jnp.exp(scores - smax)
        denom = jnp.sum(p, axis=-1, keepdims=True)
        attn = p * pl.reciprocal(denom, approx=True)                 # EUP slot
        ctx = lax.dot_general(
            attn.astype(bf16), mem_bf,
            dimension_numbers=(((2,), (1,)), ((0,), (0,))),
            preferred_element_type=f32)                              # (bt,L,H)
        q2 = q_bf.reshape(bt * L, H)
        c2 = ctx.astype(bf16).reshape(bt * L, H)
        if split_proj:
            # v5e: two K=128 passes, no lane-dim concat copy.
            h = (jnp.dot(q2, w_ref[:H, :], preferred_element_type=f32)
                 + jnp.dot(c2, w_ref[H:, :], preferred_element_type=f32)
                 + b_ref[...])
        else:
            # v6e/v7x: single K=2H=256 contraction fills the 256-wide MXU.
            qc = jnp.concatenate([q2, c2], axis=-1)                  # (bt*L, 2H)
            h = jnp.dot(qc, w_ref[...],
                        preferred_element_type=f32) + b_ref[...]
        out_ref[...] = jnp.tanh(h).reshape(bt, L, H).astype(out_ref.dtype)
        attn_ref[...] = attn.astype(attn_ref.dtype)

    attn_decoder(plan_ids_ref, plan_tab_ref, w_plan_ref, b_plan_ref,
                 plan_out_ref, plan_attn_ref)
    attn_decoder(tgt_ids_ref, tgt_tab_ref, w_dec_ref, b_dec_ref,
                 dec_out_ref, dec_attn_ref)


def nmt_plan_fused_call(src_ids, tgt_ids, plan_ids, lens3,
                        src_tab, tgt_tab, plan_tab,
                        w_enc, b_enc, w_dec, b_dec, w_plan, b_plan,
                        *, batch_tile=None, split_proj=None):
    """Single fused pallas_call.  The grid tiles the batch axis (one step for
    the tiny demo; use batch_tile <= B/2 on v7x real-batch runs so the two
    TensorCores each get grid steps)."""
    B, S, _ = src_ids.shape
    T, P = tgt_ids.shape[1], plan_ids.shape[1]
    H = w_enc.shape[0]
    # Multiples of 8 keep in-kernel reshapes tile-aligned; S, H multiples of 128
    # keep every matmul N-dim and every output store lane-dense (unmasked vst).
    assert S % 8 == 0 and T % 8 == 0 and P % 8 == 0 and H % 128 == 0

    if split_proj is None:
        split_proj = _default_split_proj()
    bt = B if batch_tile is None else batch_tile
    assert B % bt == 0
    grid = (B // bt,)

    bmap = lambda i: (i, 0, 0)       # batch-tiled 3-D blocks
    cmap = lambda i: (0, 0)          # grid-invariant tables / weights / biases

    kernel = functools.partial(_fused_nmt_plan_kernel, split_proj=split_proj)

    out_shape = (
        jax.ShapeDtypeStruct((B, T, H), jnp.bfloat16),   # dec_out (bf16 writeback)
        jax.ShapeDtypeStruct((B, T, S), jnp.float32),    # dec attn
        jax.ShapeDtypeStruct((B, P, H), jnp.bfloat16),   # plan_dec_out
        jax.ShapeDtypeStruct((B, P, S), jnp.float32),    # plan attn
    )
    in_specs = [
        pl.BlockSpec((bt, S, 1), bmap),          # src token ids
        pl.BlockSpec((bt, T, 1), bmap),          # tgt token ids
        pl.BlockSpec((bt, P, 1), bmap),          # plan token ids
        pl.BlockSpec((bt, 1, 1), bmap),          # src lengths
        pl.BlockSpec(src_tab.shape, cmap),       # embedding tables (bf16)
        pl.BlockSpec(tgt_tab.shape, cmap),
        pl.BlockSpec(plan_tab.shape, cmap),
        pl.BlockSpec((H, H), cmap),              # W_enc
        pl.BlockSpec((1, H), cmap),              # b_enc
        pl.BlockSpec((2 * H, H), cmap),          # [W1; W2] decoder
        pl.BlockSpec((1, H), cmap),
        pl.BlockSpec((2 * H, H), cmap),          # [W1; W2] plan decoder
        pl.BlockSpec((1, H), cmap),
    ]
    out_specs = (
        pl.BlockSpec((bt, T, H), bmap),
        pl.BlockSpec((bt, T, S), bmap),
        pl.BlockSpec((bt, P, H), bmap),
        pl.BlockSpec((bt, P, S), bmap),
    )
    return pl.pallas_call(
        kernel,
        out_shape=out_shape,
        grid=grid,
        in_specs=in_specs,
        out_specs=out_specs,
        compiler_params=pltpu.CompilerParams(
            dimension_semantics=("parallel",),
            # 32 MiB scoped VMEM: >= every generation's default, and leaves
            # headroom inside v7x's 64 MiB physical budget.
            vmem_limit_bytes=32 * 1024 * 1024),
    )(src_ids, tgt_ids, plan_ids, lens3,
      src_tab, tgt_tab, plan_tab,
      w_enc, b_enc, w_dec, b_dec, w_plan, b_plan)


# ----------------------------------------------------------------------------
# Params + model wrapper (only tiny id relayouts + interface transposes in XLA)
# ----------------------------------------------------------------------------
def init_params(key, src_vocab, tgt_vocab, plan_vocab, hidden):
    ks = jax.random.split(key, 6)
    scale = 0.1
    f32, bf16 = jnp.float32, jnp.bfloat16
    return {
        # embedding tables / matmul weights in bf16 (MXU operands, half the DMA)
        "src_emb":  (scale * jax.random.normal(ks[0], (src_vocab, hidden), f32)).astype(bf16),
        "tgt_emb":  (scale * jax.random.normal(ks[1], (tgt_vocab, hidden), f32)).astype(bf16),
        "plan_emb": (scale * jax.random.normal(ks[2], (plan_vocab, hidden), f32)).astype(bf16),
        "w_enc":    (scale * jax.random.normal(ks[3], (hidden, hidden), f32)).astype(bf16),
        "b_enc":    jnp.zeros((1, hidden), f32),
        # fused attention-output weights [W_query; W_context] -> (2H, H)
        "dec_w":    (scale * jax.random.normal(ks[4], (2 * hidden, hidden), f32)).astype(bf16),
        "dec_b":    jnp.zeros((1, hidden), f32),
        "plan_w":   (scale * jax.random.normal(ks[5], (2 * hidden, hidden), f32)).astype(bf16),
        "plan_b":   jnp.zeros((1, hidden), f32),
    }


def nmt_plan_model_forward(params, src, plan, tgt, src_lengths):
    """
    Args:
      src:  (src_len, batch)  int32 token ids
      plan: (plan_len, batch) int32 token ids
      tgt:  (tgt_len, batch)  int32 token ids
      src_lengths: (batch,)   int32
    Returns:
      dec_out       (tgt_len, batch, hidden)   bf16
      plan_dec_out  (plan_len, batch, hidden)  bf16
      attns         {"std": (tgt_len, batch, src_len)}  f32
      plan_attns    {"std": (plan_len, batch, src_len)} f32
      tree_loss     scalar (0.0, tree_decoder disabled)
    """
    B = src.shape[1]
    # (len, batch) id matrices -> (batch, len, 1) int32.  The only wrapper-side
    # relayouts feeding the kernel are these tiny integer transposes; the
    # embedding gather itself runs inside the kernel on the MXU.
    src_ids = jnp.transpose(src.astype(jnp.int32), (1, 0))[:, :, None]
    tgt_ids = jnp.transpose(tgt.astype(jnp.int32), (1, 0))[:, :, None]
    plan_ids = jnp.transpose(plan.astype(jnp.int32), (1, 0))[:, :, None]
    lens3 = src_lengths.astype(jnp.int32).reshape(B, 1, 1)

    dec_out_b, dec_attn_b, plan_out_b, plan_attn_b = nmt_plan_fused_call(
        src_ids, tgt_ids, plan_ids, lens3,
        params["src_emb"], params["tgt_emb"], params["plan_emb"],
        params["w_enc"], params["b_enc"],
        params["dec_w"], params["dec_b"],
        params["plan_w"], params["plan_b"])

    # Interface re-layout to OpenNMT's (len, batch, ...).  Kept in XLA: emitting
    # (len, batch, hidden) straight from the kernel needs a major-dim relayout
    # that Mosaic's transpose/reshape lowering does not cover at these shapes.
    # dec_out/plan_dec_out are bf16 now, so this copy moves half the bytes of
    # the previous version; drop it entirely if batch-major is acceptable.
    dec_out = jnp.transpose(dec_out_b, (1, 0, 2))
    plan_dec_out = jnp.transpose(plan_out_b, (1, 0, 2))
    attns = {"std": jnp.transpose(dec_attn_b, (1, 0, 2))}
    plan_attns = {"std": jnp.transpose(plan_attn_b, (1, 0, 2))}

    # TODO(synk): tree_decoder (DGL graphs, MST decode, node ordering) and
    # _fix_corrupted_plans have no clean Pallas equivalent; tree_loss = 0.0.
    tree_loss = jnp.float32(0.0)
    return dec_out, plan_dec_out, attns, plan_attns, tree_loss


# ----------------------------------------------------------------------------
# Pure-JAX reference of the same math (bf16 operands, f32 accumulation)
# ----------------------------------------------------------------------------
def nmt_plan_reference(params, src, plan, tgt, src_lengths):
    f32, bf16 = jnp.float32, jnp.bfloat16
    S = src.shape[0]
    lens = src_lengths.astype(jnp.int32)

    def embed(table, ids):                         # (L, B) ids -> (B, L, H) f32
        return jnp.take(table, jnp.transpose(ids, (1, 0)), axis=0).astype(f32)

    src_emb = embed(params["src_emb"], src)
    mem = jnp.tanh(jnp.dot(src_emb.astype(bf16), params["w_enc"],
                           preferred_element_type=f32) + params["b_enc"])
    mem_bf = mem.astype(bf16)
    pos = jnp.arange(S)[None, :]                   # (1, S)
    mask = (pos < lens[:, None]).astype(f32)       # (B, S)
    enc_state = (jnp.sum(mem_bf.astype(f32) * mask[:, :, None], axis=1,
                         keepdims=True)
                 / jnp.maximum(lens.astype(f32), 1.0)[:, None, None])

    def dec(ids, table, w, b):
        q = embed(table, ids) + enc_state
        q_bf = q.astype(bf16)
        scores = jnp.einsum("blh,bsh->bls", q_bf.astype(f32), mem_bf.astype(f32))
        scores = jnp.where(pos[:, None, :] < lens[:, None, None], scores, -1e9)
        attn = jax.nn.softmax(scores, axis=-1)
        ctx = jnp.einsum("bls,bsh->blh", attn.astype(bf16).astype(f32),
                         mem_bf.astype(f32))
        qc = jnp.concatenate([q_bf.astype(f32), ctx.astype(bf16).astype(f32)],
                             axis=-1)
        h = jnp.dot(qc, w.astype(f32)) + b
        out = jnp.tanh(h).astype(bf16)
        return jnp.transpose(out, (1, 0, 2)), jnp.transpose(attn, (1, 0, 2))

    dec_out, attn = dec(tgt, params["tgt_emb"], params["dec_w"], params["dec_b"])
    plan_out, plan_attn = dec(plan, params["plan_emb"], params["plan_w"],
                              params["plan_b"])
    return dec_out, plan_out, attn, plan_attn


if __name__ == "__main__":
    # Small demo shapes consistent with the module's (len, batch) convention.
    # src_len and hidden are multiples of 128 (lane-dense stores / full MXU N
    # dims); tgt_len / plan_len are multiples of 8 (tile-aligned reshapes).
    batch, src_len, tgt_len, plan_len, hidden = 2, 128, 32, 16, 128
    src_vocab, tgt_vocab, plan_vocab = 64, 48, 32

    key = jax.random.PRNGKey(0)
    k_p, k_src, k_tgt, k_plan = jax.random.split(key, 4)
    params = init_params(k_p, src_vocab, tgt_vocab, plan_vocab, hidden)

    src = jax.random.randint(k_src, (src_len, batch), 0, src_vocab, jnp.int32)
    tgt = jax.random.randint(k_tgt, (tgt_len, batch), 0, tgt_vocab, jnp.int32)
    plan = jax.random.randint(k_plan, (plan_len, batch), 0, plan_vocab, jnp.int32)
    src_lengths = jnp.array([src_len, 91], dtype=jnp.int32)

    fwd = jax.jit(nmt_plan_model_forward)
    dec_out, plan_dec_out, attns, plan_attns, tree_loss = fwd(
        params, src, plan, tgt, src_lengths)
    jax.block_until_ready((dec_out, plan_dec_out, attns, plan_attns, tree_loss))

    # shape / sanity checks
    assert dec_out.shape == (tgt_len, batch, hidden)
    assert plan_dec_out.shape == (plan_len, batch, hidden)
    assert attns["std"].shape == (tgt_len, batch, src_len)
    assert plan_attns["std"].shape == (plan_len, batch, src_len)
    assert bool(jnp.all(jnp.isfinite(dec_out.astype(jnp.float32))))
    assert bool(jnp.all(jnp.isfinite(plan_dec_out.astype(jnp.float32))))
    # attention rows are probability distributions (approx reciprocal -> loose tol)
    assert bool(jnp.allclose(jnp.sum(attns["std"], axis=-1), 1.0, atol=5e-3))
    assert bool(jnp.allclose(jnp.sum(plan_attns["std"], axis=-1), 1.0, atol=5e-3))
    # positions past the second example's source length get (near-)zero attention
    assert bool(jnp.all(attns["std"][:, 1, 91:] < 1e-6))
    assert bool(jnp.all(plan_attns["std"][:, 1, 91:] < 1e-6))

    # parity vs the pure-JAX reference (bf16 operands + approx reciprocal -> loose tol)
    ref_dec, ref_plan, ref_attn, ref_plan_attn = jax.jit(nmt_plan_reference)(
        params, src, plan, tgt, src_lengths)
    assert bool(jnp.allclose(dec_out.astype(jnp.float32),
                             ref_dec.astype(jnp.float32), atol=5e-2))
    assert bool(jnp.allclose(plan_dec_out.astype(jnp.float32),
                             ref_plan.astype(jnp.float32), atol=5e-2))
    assert bool(jnp.allclose(attns["std"], ref_attn, atol=1e-2))
    assert bool(jnp.allclose(plan_attns["std"], ref_plan_attn, atol=1e-2))

    print("KERNEL_OK")
</pallas_src>

<mosaic_0001>
module attributes {stable_mosaic.version = 11 : i64} {
  func.func @_fused_nmt_plan_kernel(%arg0: i32, %arg1: memref<2x128x1xi32, #tpu.memory_space<vmem>>, %arg2: memref<2x32x1xi32, #tpu.memory_space<vmem>>, %arg3: memref<2x16x1xi32, #tpu.memory_space<vmem>>, %arg4: memref<2x1x1xi32, #tpu.memory_space<vmem>>, %arg5: memref<64x128xbf16, #tpu.memory_space<vmem>>, %arg6: memref<48x128xbf16, #tpu.memory_space<vmem>>, %arg7: memref<32x128xbf16, #tpu.memory_space<vmem>>, %arg8: memref<128x128xbf16, #tpu.memory_space<vmem>>, %arg9: memref<1x128xf32, #tpu.memory_space<vmem>>, %arg10: memref<256x128xbf16, #tpu.memory_space<vmem>>, %arg11: memref<1x128xf32, #tpu.memory_space<vmem>>, %arg12: memref<256x128xbf16, #tpu.memory_space<vmem>>, %arg13: memref<1x128xf32, #tpu.memory_space<vmem>>, %arg14: memref<2x32x128xbf16, #tpu.memory_space<vmem>>, %arg15: memref<2x32x128xf32, #tpu.memory_space<vmem>>, %arg16: memref<2x16x128xbf16, #tpu.memory_space<vmem>>, %arg17: memref<2x16x128xf32, #tpu.memory_space<vmem>>) attributes {dimension_semantics = [#tpu.dimension_semantics<parallel>], iteration_bounds = array<i64: 1>, scalar_prefetch = 0 : i64, scratch_operands = 0 : i64, tpu.core_type = #tpu.core_type<tc>, window_params = [{transform_indices = @transform_0, window_bounds = array<i64: 2, 128, 1>}, {transform_indices = @transform_1, window_bounds = array<i64: 2, 32, 1>}, {transform_indices = @transform_2, window_bounds = array<i64: 2, 16, 1>}, {transform_indices = @transform_3, window_bounds = array<i64: 2, 1, 1>}, {pipeline_mode = #tpu.pipeline_mode<synchronous>, transform_indices = @transform_4, window_bounds = array<i64: 64, 128>}, {pipeline_mode = #tpu.pipeline_mode<synchronous>, transform_indices = @transform_5, window_bounds = array<i64: 48, 128>}, {pipeline_mode = #tpu.pipeline_mode<synchronous>, transform_indices = @transform_6, window_bounds = array<i64: 32, 128>}, {pipeline_mode = #tpu.pipeline_mode<synchronous>, transform_indices = @transform_7, window_bounds = array<i64: 128, 128>}, {pipeline_mode = #tpu.pipeline_mode<synchronous>, transform_indices = @transform_8, window_bounds = array<i64: 1, 128>}, {pipeline_mode = #tpu.pipeline_mode<synchronous>, transform_indices = @transform_9, window_bounds = array<i64: 256, 128>}, {pipeline_mode = #tpu.pipeline_mode<synchronous>, transform_indices = @transform_10, window_bounds = array<i64: 1, 128>}, {pipeline_mode = #tpu.pipeline_mode<synchronous>, transform_indices = @transform_11, window_bounds = array<i64: 256, 128>}, {pipeline_mode = #tpu.pipeline_mode<synchronous>, transform_indices = @transform_12, window_bounds = array<i64: 1, 128>}, {transform_indices = @transform_13, window_bounds = array<i64: 2, 32, 128>}, {transform_indices = @transform_14, window_bounds = array<i64: 2, 32, 128>}, {transform_indices = @transform_15, window_bounds = array<i64: 2, 16, 128>}, {transform_indices = @transform_16, window_bounds = array<i64: 2, 16, 128>}]} {
    %c0 = arith.constant 0 : index
    %c0_0 = arith.constant 0 : index
    %c0_1 = arith.constant 0 : index
    %0 = vector.load %arg1[%c0, %c0_0, %c0_1] : memref<2x128x1xi32, #tpu.memory_space<vmem>>, vector<2x128x1xi32>
    %1 = vector.shape_cast %0 : vector<2x128x1xi32> to vector<256x1xi32>
    %2 = tpu.iota {dimensions = array<i32: 1>} : vector<256x64xi32>
    %3 = vector.broadcast %1 : vector<256x1xi32> to vector<256x64xi32>
    %4 = arith.cmpi eq, %2, %3 : vector<256x64xi32>
    %5 = arith.extui %4 : vector<256x64xi1> to vector<256x64xi32>
    %6 = arith.sitofp %5 : vector<256x64xi32> to vector<256x64xf32>
    %7 = arith.truncf %6 : vector<256x64xf32> to vector<256x64xbf16>
    %c0_2 = arith.constant 0 : index
    %c0_3 = arith.constant 0 : index
    %8 = vector.load %arg5[%c0_2, %c0_3] : memref<64x128xbf16, #tpu.memory_space<vmem>>, vector<64x128xbf16>
    %cst = arith.constant dense<0.000000e+00> : vector<256x128xf32>
    %9 = tpu.matmul %7, %8, %cst {dimension_numbers = #tpu.dot_dimension_numbers<[1], [0], [0], [1], [0, 0, 1, 1], [], []>} : vector<256x64xbf16>, vector<64x128xbf16>, vector<256x128xf32> -> vector<256x128xf32>
    %10 = arith.truncf %9 : vector<256x128xf32> to vector<256x128xbf16>
    %c0_4 = arith.constant 0 : index
    %c0_5 = arith.constant 0 : index
    %11 = vector.load %arg8[%c0_4, %c0_5] : memref<128x128xbf16, #tpu.memory_space<vmem>>, vector<128x128xbf16>
    %cst_6 = arith.constant dense<0.000000e+00> : vector<256x128xf32>
    %12 = tpu.matmul %10, %11, %cst_6 {dimension_numbers = #tpu.dot_dimension_numbers<[1], [0], [0], [1], [0, 0, 1, 1], [], []>} : vector<256x128xbf16>, vector<128x128xbf16>, vector<256x128xf32> -> vector<256x128xf32>
    %c0_7 = arith.constant 0 : index
    %c0_8 = arith.constant 0 : index
    %13 = vector.load %arg9[%c0_7, %c0_8] : memref<1x128xf32, #tpu.memory_space<vmem>>, vector<1x128xf32>
    %14 = vector.broadcast %13 : vector<1x128xf32> to vector<256x128xf32>
    %15 = arith.addf %12, %14 : vector<256x128xf32>
    %16 = math.tanh %15 : vector<256x128xf32>
    %17 = arith.truncf %16 : vector<256x128xf32> to vector<256x128xbf16>
    %18 = vector.shape_cast %17 : vector<256x128xbf16> to vector<2x128x128xbf16>
    %c0_9 = arith.constant 0 : index
    %c0_10 = arith.constant 0 : index
    %c0_11 = arith.constant 0 : index
    %19 = vector.load %arg4[%c0_9, %c0_10, %c0_11] : memref<2x1x1xi32, #tpu.memory_space<vmem>>, vector<2x1x1xi32>
    %20 = tpu.iota {dimensions = array<i32: 2>} : vector<2x1x128xi32>
    %21 = vector.broadcast %19 : vector<2x1x1xi32> to vector<2x1x128xi32>
    %22 = arith.cmpi slt, %20, %21 : vector<2x1x128xi32>
    %23 = arith.extui %22 : vector<2x1x128xi1> to vector<2x1x128xi32>
    %24 = arith.sitofp %23 : vector<2x1x128xi32> to vector<2x1x128xf32>
    %25 = arith.truncf %24 : vector<2x1x128xf32> to vector<2x1x128xbf16>
    %cst_12 = arith.constant dense<0.000000e+00> : vector<2x1x128xf32>
    %26 = tpu.matmul %25, %18, %cst_12 {dimension_numbers = #tpu.dot_dimension_numbers<[2], [1], [1], [2], [0, 0, 0, 1, 1, 2], [0], [0]>} : vector<2x1x128xbf16>, vector<2x128x128xbf16>, vector<2x1x128xf32> -> vector<2x1x128xf32>
    %27 = arith.sitofp %19 : vector<2x1x1xi32> to vector<2x1x1xf32>
    %cst_13 = arith.constant 1.000000e+00 : f32
    %28 = vector.broadcast %cst_13 : f32 to vector<2x1x1xf32>
    %29 = arith.maximumf %27, %28 : vector<2x1x1xf32>
    %cst_14 = arith.constant 1.000000e+00 : f32
    %30 = vector.broadcast %cst_14 : f32 to vector<2x1x1xf32>
    %31 = arith.divf %30, %29 : vector<2x1x1xf32>
    %32 = vector.broadcast %31 : vector<2x1x1xf32> to vector<2x1x128xf32>
    %33 = arith.mulf %26, %32 : vector<2x1x128xf32>
    %c0_15 = arith.constant 0 : index
    %c0_16 = arith.constant 0 : index
    %c0_17 = arith.constant 0 : index
    %34 = vector.load %arg3[%c0_15, %c0_16, %c0_17] : memref<2x16x1xi32, #tpu.memory_space<vmem>>, vector<2x16x1xi32>
    %35 = vector.shape_cast %34 : vector<2x16x1xi32> to vector<32x1xi32>
    %36 = tpu.iota {dimensions = array<i32: 1>} : vector<32x32xi32>
    %37 = vector.broadcast %35 : vector<32x1xi32> to vector<32x32xi32>
    %38 = arith.cmpi eq, %36, %37 : vector<32x32xi32>
    %39 = arith.extui %38 : vector<32x32xi1> to vector<32x32xi32>
    %40 = arith.sitofp %39 : vector<32x32xi32> to vector<32x32xf32>
    %41 = arith.truncf %40 : vector<32x32xf32> to vector<32x32xbf16>
    %c0_18 = arith.constant 0 : index
    %c0_19 = arith.constant 0 : index
    %42 = vector.load %arg7[%c0_18, %c0_19] : memref<32x128xbf16, #tpu.memory_space<vmem>>, vector<32x128xbf16>
    %cst_20 = arith.constant dense<0.000000e+00> : vector<32x128xf32>
    %43 = tpu.matmul %41, %42, %cst_20 {dimension_numbers = #tpu.dot_dimension_numbers<[1], [0], [0], [1], [0, 0, 1, 1], [], []>} : vector<32x32xbf16>, vector<32x128xbf16>, vector<32x128xf32> -> vector<32x128xf32>
    %44 = vector.shape_cast %43 : vector<32x128xf32> to vector<2x16x128xf32>
    %45 = vector.broadcast %33 : vector<2x1x128xf32> to vector<2x16x128xf32>
    %46 = arith.addf %44, %45 : vector<2x16x128xf32>
    %47 = arith.truncf %46 : vector<2x16x128xf32> to vector<2x16x128xbf16>
    %cst_21 = arith.constant dense<0.000000e+00> : vector<2x16x128xf32>
    %48 = tpu.matmul %47, %18, %cst_21 {dimension_numbers = #tpu.dot_dimension_numbers<[2], [2], [1], [1], [0, 0, 0, 1, 1, 1], [0], [0]>} : vector<2x16x128xbf16>, vector<2x128x128xbf16>, vector<2x16x128xf32> -> vector<2x16x128xf32>
    %49 = tpu.iota {dimensions = array<i32: 2>} : vector<2x16x128xi32>
    %50 = vector.broadcast %19 : vector<2x1x1xi32> to vector<2x16x128xi32>
    %51 = arith.cmpi slt, %49, %50 : vector<2x16x128xi32>
    %cst_22 = arith.constant -1.000000e+09 : f32
    %52 = vector.broadcast %cst_22 : f32 to vector<2x16x128xf32>
    %53 = arith.select %51, %48, %52 : vector<2x16x128xi1>, vector<2x16x128xf32>
    %cst_23 = arith.constant dense<0xFF800000> : vector<2x16xf32>
    %54 = vector.multi_reduction <maximumf>, %53, %cst_23 [2] : vector<2x16x128xf32> to vector<2x16xf32>
    %55 = vector.shape_cast %54 : vector<2x16xf32> to vector<2x16x1xf32>
    %56 = vector.broadcast %55 : vector<2x16x1xf32> to vector<2x16x128xf32>
    %57 = arith.subf %53, %56 : vector<2x16x128xf32>
    %58 = math.exp %57 : vector<2x16x128xf32>
    %cst_24 = arith.constant dense<0.000000e+00> : vector<2x16xf32>
    %59 = vector.multi_reduction <add>, %58, %cst_24 [2] : vector<2x16x128xf32> to vector<2x16xf32>
    %60 = vector.shape_cast %59 : vector<2x16xf32> to vector<2x16x1xf32>
    %61 = tpu.reciprocal %60 {approx = true} : vector<2x16x1xf32> -> vector<2x16x1xf32>
    %62 = vector.broadcast %61 : vector<2x16x1xf32> to vector<2x16x128xf32>
    %63 = arith.mulf %58, %62 : vector<2x16x128xf32>
    %64 = arith.truncf %63 : vector<2x16x128xf32> to vector<2x16x128xbf16>
    %cst_25 = arith.constant dense<0.000000e+00> : vector<2x16x128xf32>
    %65 = tpu.matmul %64, %18, %cst_25 {dimension_numbers = #tpu.dot_dimension_numbers<[2], [1], [1], [2], [0, 0, 0, 1, 1, 2], [0], [0]>} : vector<2x16x128xbf16>, vector<2x128x128xbf16>, vector<2x16x128xf32> -> vector<2x16x128xf32>
    %66 = vector.shape_cast %47 : vector<2x16x128xbf16> to vector<32x128xbf16>
    %67 = arith.truncf %65 : vector<2x16x128xf32> to vector<2x16x128xbf16>
    %68 = vector.shape_cast %67 : vector<2x16x128xbf16> to vector<32x128xbf16>
    %69 = tpu.concatenate %66, %68 in 1 : vector<32x128xbf16>, vector<32x128xbf16> -> vector<32x256xbf16>
    %c0_26 = arith.constant 0 : index
    %c0_27 = arith.constant 0 : index
    %70 = vector.load %arg12[%c0_26, %c0_27] : memref<256x128xbf16, #tpu.memory_space<vmem>>, vector<256x128xbf16>
    %cst_28 = arith.constant dense<0.000000e+00> : vector<32x128xf32>
    %71 = tpu.matmul %69, %70, %cst_28 {dimension_numbers = #tpu.dot_dimension_numbers<[1], [0], [0], [1], [0, 0, 1, 1], [], []>} : vector<32x256xbf16>, vector<256x128xbf16>, vector<32x128xf32> -> vector<32x128xf32>
    %c0_29 = arith.constant 0 : index
    %c0_30 = arith.constant 0 : index
    %72 = vector.load %arg13[%c0_29, %c0_30] : memref<1x128xf32, #tpu.memory_space<vmem>>, vector<1x128xf32>
    %73 = vector.broadcast %72 : vector<1x128xf32> to vector<32x128xf32>
    %74 = arith.addf %71, %73 : vector<32x128xf32>
    %75 = math.tanh %74 : vector<32x128xf32>
    %76 = vector.shape_cast %75 : vector<32x128xf32> to vector<2x16x128xf32>
    %77 = arith.truncf %76 : vector<2x16x128xf32> to vector<2x16x128xbf16>
    %c0_31 = arith.constant 0 : index
    %c0_32 = arith.constant 0 : index
    %c0_33 = arith.constant 0 : index
    %78 = vector.load %arg16[%c0_31, %c0_32, %c0_33] : memref<2x16x128xbf16, #tpu.memory_space<vmem>>, vector<2x16x128xbf16>
    tpu.vector_store %arg16[%c0_31, %c0_32, %c0_33], %77 {strides = array<i32>} : memref<2x16x128xbf16, #tpu.memory_space<vmem>>, vector<2x16x128xbf16>,
    %c0_34 = arith.constant 0 : index
    %c0_35 = arith.constant 0 : index
    %c0_36 = arith.constant 0 : index
    %79 = vector.load %arg17[%c0_34, %c0_35, %c0_36] : memref<2x16x128xf32, #tpu.memory_space<vmem>>, vector<2x16x128xf32>
    tpu.vector_store %arg17[%c0_34, %c0_35, %c0_36], %63 {strides = array<i32>} : memref<2x16x128xf32, #tpu.memory_space<vmem>>, vector<2x16x128xf32>,
    %c0_37 = arith.constant 0 : index
    %c0_38 = arith.constant 0 : index
    %c0_39 = arith.constant 0 : index
    %80 = vector.load %arg2[%c0_37, %c0_38, %c0_39] : memref<2x32x1xi32, #tpu.memory_space<vmem>>, vector<2x32x1xi32>
    %81 = vector.shape_cast %80 : vector<2x32x1xi32> to vector<64x1xi32>
    %82 = tpu.iota {dimensions = array<i32: 1>} : vector<64x48xi32>
    %83 = vector.broadcast %81 : vector<64x1xi32> to vector<64x48xi32>
    %84 = arith.cmpi eq, %82, %83 : vector<64x48xi32>
    %85 = arith.extui %84 : vector<64x48xi1> to vector<64x48xi32>
    %86 = arith.sitofp %85 : vector<64x48xi32> to vector<64x48xf32>
    %87 = arith.truncf %86 : vector<64x48xf32> to vector<64x48xbf16>
    %c0_40 = arith.constant 0 : index
    %c0_41 = arith.constant 0 : index
    %88 = vector.load %arg6[%c0_40, %c0_41] : memref<48x128xbf16, #tpu.memory_space<vmem>>, vector<48x128xbf16>
    %cst_42 = arith.constant dense<0.000000e+00> : vector<64x128xf32>
    %89 = tpu.matmul %87, %88, %cst_42 {dimension_numbers = #tpu.dot_dimension_numbers<[1], [0], [0], [1], [0, 0, 1, 1], [], []>} : vector<64x48xbf16>, vector<48x128xbf16>, vector<64x128xf32> -> vector<64x128xf32>
    %90 = vector.shape_cast %89 : vector<64x128xf32> to vector<2x32x128xf32>
    %91 = vector.broadcast %33 : vector<2x1x128xf32> to vector<2x32x128xf32>
    %92 = arith.addf %90, %91 : vector<2x32x128xf32>
    %93 = arith.truncf %92 : vector<2x32x128xf32> to vector<2x32x128xbf16>
    %cst_43 = arith.constant dense<0.000000e+00> : vector<2x32x128xf32>
    %94 = tpu.matmul %93, %18, %cst_43 {dimension_numbers = #tpu.dot_dimension_numbers<[2], [2], [1], [1], [0, 0, 0, 1, 1, 1], [0], [0]>} : vector<2x32x128xbf16>, vector<2x128x128xbf16>, vector<2x32x128xf32> -> vector<2x32x128xf32>
    %95 = tpu.iota {dimensions = array<i32: 2>} : vector<2x32x128xi32>
    %96 = vector.broadcast %19 : vector<2x1x1xi32> to vector<2x32x128xi32>
    %97 = arith.cmpi slt, %95, %96 : vector<2x32x128xi32>
    %cst_44 = arith.constant -1.000000e+09 : f32
    %98 = vector.broadcast %cst_44 : f32 to vector<2x32x128xf32>
    %99 = arith.select %97, %94, %98 : vector<2x32x128xi1>, vector<2x32x128xf32>
    %cst_45 = arith.constant dense<0xFF800000> : vector<2x32xf32>
    %100 = vector.multi_reduction <maximumf>, %99, %cst_45 [2] : vector<2x32x128xf32> to vector<2x32xf32>
    %101 = vector.shape_cast %100 : vector<2x32xf32> to vector<2x32x1xf32>
    %102 = vector.broadcast %101 : vector<2x32x1xf32> to vector<2x32x128xf32>
    %103 = arith.subf %99, %102 : vector<2x32x128xf32>
    %104 = math.exp %103 : vector<2x32x128xf32>
    %cst_46 = arith.constant dense<0.000000e+00> : vector<2x32xf32>
    %105 = vector.multi_reduction <add>, %104, %cst_46 [2] : vector<2x32x128xf32> to vector<2x32xf32>
    %106 = vector.shape_cast %105 : vector<2x32xf32> to vector<2x32x1xf32>
    %107 = tpu.reciprocal %106 {approx = true} : vector<2x32x1xf32> -> vector<2x32x1xf32>
    %108 = vector.broadcast %107 : vector<2x32x1xf32> to vector<2x32x128xf32>
    %109 = arith.mulf %104, %108 : vector<2x32x128xf32>
    %110 = arith.truncf %109 : vector<2x32x128xf32> to vector<2x32x128xbf16>
    %cst_47 = arith.constant dense<0.000000e+00> : vector<2x32x128xf32>
    %111 = tpu.matmul %110, %18, %cst_47 {dimension_numbers = #tpu.dot_dimension_numbers<[2], [1], [1], [2], [0, 0, 0, 1, 1, 2], [0], [0]>} : vector<2x32x128xbf16>, vector<2x128x128xbf16>, vector<2x32x128xf32> -> vector<2x32x128xf32>
    %112 = vector.shape_cast %93 : vector<2x32x128xbf16> to vector<64x128xbf16>
    %113 = arith.truncf %111 : vector<2x32x128xf32> to vector<2x32x128xbf16>
    %114 = vector.shape_cast %113 : vector<2x32x128xbf16> to vector<64x128xbf16>
    %115 = tpu.concatenate %112, %114 in 1 : vector<64x128xbf16>, vector<64x128xbf16> -> vector<64x256xbf16>
    %c0_48 = arith.constant 0 : index
    %c0_49 = arith.constant 0 : index
    %116 = vector.load %arg10[%c0_48, %c0_49] : memref<256x128xbf16, #tpu.memory_space<vmem>>, vector<256x128xbf16>
    %cst_50 = arith.constant dense<0.000000e+00> : vector<64x128xf32>
    %117 = tpu.matmul %115, %116, %cst_50 {dimension_numbers = #tpu.dot_dimension_numbers<[1], [0], [0], [1], [0, 0, 1, 1], [], []>} : vector<64x256xbf16>, vector<256x128xbf16>, vector<64x128xf32> -> vector<64x128xf32>
    %c0_51 = arith.constant 0 : index
    %c0_52 = arith.constant 0 : index
    %118 = vector.load %arg11[%c0_51, %c0_52] : memref<1x128xf32, #tpu.memory_space<vmem>>, vector<1x128xf32>
    %119 = vector.broadcast %118 : vector<1x128xf32> to vector<64x128xf32>
    %120 = arith.addf %117, %119 : vector<64x128xf32>
    %121 = math.tanh %120 : vector<64x128xf32>
    %122 = vector.shape_cast %121 : vector<64x128xf32> to vector<2x32x128xf32>
    %123 = arith.truncf %122 : vector<2x32x128xf32> to vector<2x32x128xbf16>
    %c0_53 = arith.constant 0 : index
    %c0_54 = arith.constant 0 : index
    %c0_55 = arith.constant 0 : index
    %124 = vector.load %arg14[%c0_53, %c0_54, %c0_55] : memref<2x32x128xbf16, #tpu.memory_space<vmem>>, vector<2x32x128xbf16>
    tpu.vector_store %arg14[%c0_53, %c0_54, %c0_55], %123 {strides = array<i32>} : memref<2x32x128xbf16, #tpu.memory_space<vmem>>, vector<2x32x128xbf16>,
    %c0_56 = arith.constant 0 : index
    %c0_57 = arith.constant 0 : index
    %c0_58 = arith.constant 0 : index
    %125 = vector.load %arg15[%c0_56, %c0_57, %c0_58] : memref<2x32x128xf32, #tpu.memory_space<vmem>>, vector<2x32x128xf32>
    tpu.vector_store %arg15[%c0_56, %c0_57, %c0_58], %109 {strides = array<i32>} : memref<2x32x128xf32, #tpu.memory_space<vmem>>, vector<2x32x128xf32>,
    return
  }
  func.func @transform_0(%arg0: i32) -> (i32, i32, i32) {
    %c0_i32 = arith.constant 0 : i32
    %c0_i32_0 = arith.constant 0 : i32
    %c0_i32_1 = arith.constant 0 : i32
    return %arg0, %c0_i32, %c0_i32_0 : i32, i32, i32
  }
  func.func @transform_1(%arg0: i32) -> (i32, i32, i32) {
    %c0_i32 = arith.constant 0 : i32
    %c0_i32_0 = arith.constant 0 : i32
    %c0_i32_1 = arith.constant 0 : i32
    return %arg0, %c0_i32, %c0_i32_0 : i32, i32, i32
  }
  func.func @transform_2(%arg0: i32) -> (i32, i32, i32) {
    %c0_i32 = arith.constant 0 : i32
    %c0_i32_0 = arith.constant 0 : i32
    %c0_i32_1 = arith.constant 0 : i32
    return %arg0, %c0_i32, %c0_i32_0 : i32, i32, i32
  }
  func.func @transform_3(%arg0: i32) -> (i32, i32, i32) {
    %c0_i32 = arith.constant 0 : i32
    %c0_i32_0 = arith.constant 0 : i32
    %c0_i32_1 = arith.constant 0 : i32
    return %arg0, %c0_i32, %c0_i32_0 : i32, i32, i32
  }
  func.func @transform_4(%arg0: i32) -> (i32, i32) {
    %c0_i32 = arith.constant 0 : i32
    %c0_i32_0 = arith.constant 0 : i32
    %c0_i32_1 = arith.constant 0 : i32
    return %c0_i32, %c0_i32_0 : i32, i32
  }
  func.func @transform_5(%arg0: i32) -> (i32, i32) {
    %c0_i32 = arith.constant 0 : i32
    %c0_i32_0 = arith.constant 0 : i32
    %c0_i32_1 = arith.constant 0 : i32
    return %c0_i32, %c0_i32_0 : i32, i32
  }
  func.func @transform_6(%arg0: i32) -> (i32, i32) {
    %c0_i32 = arith.constant 0 : i32
    %c0_i32_0 = arith.constant 0 : i32
    %c0_i32_1 = arith.constant 0 : i32
    return %c0_i32, %c0_i32_0 : i32, i32
  }
  func.func @transform_7(%arg0: i32) -> (i32, i32) {
    %c0_i32 = arith.constant 0 : i32
    %c0_i32_0 = arith.constant 0 : i32
    %c0_i32_1 = arith.constant 0 : i32
    return %c0_i32, %c0_i32_0 : i32, i32
  }
  func.func @transform_8(%arg0: i32) -> (i32, i32) {
    %c0_i32 = arith.constant 0 : i32
    %c0_i32_0 = arith.constant 0 : i32
    %c0_i32_1 = arith.constant 0 : i32
    return %c0_i32, %c0_i32_0 : i32, i32
  }
  func.func @transform_9(%arg0: i32) -> (i32, i32) {
    %c0_i32 = arith.constant 0 : i32
    %c0_i32_0 = arith.constant 0 : i32
    %c0_i32_1 = arith.constant 0 : i32
    return %c0_i32, %c0_i32_0 : i32, i32
  }
  func.func @transform_10(%arg0: i32) -> (i32, i32) {
    %c0_i32 = arith.constant 0 : i32
    %c0_i32_0 = arith.constant 0 : i32
    %c0_i32_1 = arith.constant 0 : i32
    return %c0_i32, %c0_i32_0 : i32, i32
  }
  func.func @transform_11(%arg0: i32) -> (i32, i32) {
    %c0_i32 = arith.constant 0 : i32
    %c0_i32_0 = arith.constant 0 : i32
    %c0_i32_1 = arith.constant 0 : i32
    return %c0_i32, %c0_i32_0 : i32, i32
  }
  func.func @transform_12(%arg0: i32) -> (i32, i32) {
    %c0_i32 = arith.constant 0 : i32
    %c0_i32_0 = arith.constant 0 : i32
    %c0_i32_1 = arith.constant 0 : i32
    return %c0_i32, %c0_i32_0 : i32, i32
  }
  func.func @transform_13(%arg0: i32) -> (i32, i32, i32) {
    %c0_i32 = arith.constant 0 : i32
    %c0_i32_0 = arith.constant 0 : i32
    %c0_i32_1 = arith.constant 0 : i32
    return %arg0, %c0_i32, %c0_i32_0 : i32, i32, i32
  }
  func.func @transform_14(%arg0: i32) -> (i32, i32, i32) {
    %c0_i32 = arith.constant 0 : i32
    %c0_i32_0 = arith.constant 0 : i32
    %c0_i32_1 = arith.constant 0 : i32
    return %arg0, %c0_i32, %c0_i32_0 : i32, i32, i32
  }
  func.func @transform_15(%arg0: i32) -> (i32, i32, i32) {
    %c0_i32 = arith.constant 0 : i32
    %c0_i32_0 = arith.constant 0 : i32
    %c0_i32_1 = arith.constant 0 : i32
    return %arg0, %c0_i32, %c0_i32_0 : i32, i32, i32
  }
  func.func @transform_16(%arg0: i32) -> (i32, i32, i32) {
    %c0_i32 = arith.constant 0 : i32
    %c0_i32_0 = arith.constant 0 : i32
    %c0_i32_1 = arith.constant 0 : i32
    return %arg0, %c0_i32, %c0_i32_0 : i32, i32, i32
  }
}

</mosaic_0001>

<llo_original>
// kernel: nmt_plan_model_forward.1
$region0: #{nmt_plan_model_forward.1}
  #allocation0 [shape = 'u32[]', space=smem, size = 0x4, offset = 0x4, fixed_abs, tag = 'smem constant byte address 0x4 - core index']
  #allocation1 [shape = 'u32[144,128]{1,0:T(1,128)}', space=vmem, size = 0x12000, scoped, tag = 'internal scratch']
  %s0 = inlined_call_operand.vmem [shape: s32[2,128,1], index: 0, kind: input, shape index: {}]
  %s1 = inlined_call_operand.vmem [shape: s32[2,32,1], index: 1, kind: input, shape index: {}]
  %s2 = inlined_call_operand.vmem [shape: s32[2,16,1], index: 2, kind: input, shape index: {}]
  %s3 = inlined_call_operand.vmem [shape: s32[2,1,1], index: 3, kind: input, shape index: {}]
  %s4 = inlined_call_operand.vmem [shape: bf16[64,128], index: 4, kind: input, shape index: {}]
  %s5 = inlined_call_operand.hbm [shape: bf16[48,128], index: 5, kind: input, shape index: {}]
  %s6 = inlined_call_operand.vmem [shape: bf16[32,128], index: 6, kind: input, shape index: {}]
  %s7 = inlined_call_operand.vmem [shape: bf16[128,128], index: 7, kind: input, shape index: {}]
  %s8 = inlined_call_operand.vmem [shape: f32[1,128], index: 8, kind: input, shape index: {}]
  %s9 = inlined_call_operand.vmem [shape: bf16[256,128], index: 9, kind: input, shape index: {}]
  %s10 = inlined_call_operand.vmem [shape: f32[1,128], index: 10, kind: input, shape index: {}]
  %s11 = inlined_call_operand.vmem [shape: bf16[256,128], index: 11, kind: input, shape index: {}]
  %s12 = inlined_call_operand.hbm [shape: f32[1,128], index: 12, kind: input, shape index: {}]
  %s13 = inlined_call_operand.vmem [shape: bf16[2,32,128], index: 13, kind: output, shape index: {0}]
  %s14 = inlined_call_operand.vmem [shape: f32[2,32,128], index: 14, kind: output, shape index: {1}]
  %s15 = inlined_call_operand.vmem [shape: bf16[2,16,128], index: 15, kind: output, shape index: {2}]
  %s16 = inlined_call_operand.vmem [shape: f32[2,16,128], index: 16, kind: output, shape index: {3}]
  %17 = xla_tuple %s13, %s14, %s15, %s16
  %s18 = sld [smem:[#allocation0]]
  $region94: #{nmt_plan_model_forward.1} parent=0
    _
  %s20 = ssub.s32 1, %s18
  %s21 = scalar_select 0, %s20, %s18
  $region1: #{nmt_plan_model_forward.1} parent=0
    #allocation2 [shape = 'u8[12288]{0}', space=vmem, size = 0x3000, scoped, tag = 'input window, operand 5, single buffered']
    #allocation3 [shape = 's32[1]{0}', space=sflag, size = 0x4, scoped, tag = 'scoped memory for nmt_plan_model_forward.1']
    #allocation4 [shape = 'u8[512]{0}', space=vmem, size = 0x400, scoped, tag = 'input window, operand 12, single buffered']
    #allocation5 [shape = 's32[1]{0}', space=sflag, size = 0x4, scoped, tag = 'scoped memory for nmt_plan_model_forward.1']
    %22 = vsyncpa [#allocation3], 0
    %23 = vsyncpa [#allocation5], 0
    // Predicated region
    $region2: #{nmt_plan_model_forward.1} parent=1 // pred_check
      _
    $region3: #{nmt_plan_model_forward.1} parent=1 // pred_check_branch
      %25 = sbr.rel (0) target = $region5
    $region4: #{nmt_plan_model_forward.1} parent=1 // pred_region
      _
    $region5: #{nmt_plan_model_forward.1} parent=1 // pred_fallthru
      _
    // Predicated region
    $region6: #{nmt_plan_model_forward.1} parent=1 // pred_check
      _
    $region7: #{nmt_plan_model_forward.1} parent=1 // pred_check_branch
      %27 = sbr.rel (0) target = $region9
    $region8: #{nmt_plan_model_forward.1} parent=1 // pred_region
      _
    $region9: #{nmt_plan_model_forward.1} parent=1 // pred_fallthru
      _
    // Predicated region
    $region10: #{nmt_plan_model_forward.1} parent=1 // pred_check
      _
    $region11: #{nmt_plan_model_forward.1} parent=1 // pred_check_branch
      %29 = sbr.rel (0) target = $region13
    $region12: #{nmt_plan_model_forward.1} parent=1 // pred_region
      _
    $region13: #{nmt_plan_model_forward.1} parent=1 // pred_fallthru
      _
    // Predicated region
    $region14: #{nmt_plan_model_forward.1} parent=1 // pred_check
      _
    $region15: #{nmt_plan_model_forward.1} parent=1 // pred_check_branch
      %31 = sbr.rel (0) target = $region17
    $region16: #{nmt_plan_model_forward.1} parent=1 // pred_region
      _
    $region17: #{nmt_plan_model_forward.1} parent=1 // pred_fallthru
      _
    // Predicated region
    $region18: #{nmt_plan_model_forward.1} parent=1 // pred_check
      _
    $region19: #{nmt_plan_model_forward.1} parent=1 // pred_check_branch
      %33 = sbr.rel (0) target = $region21
    $region20: #{nmt_plan_model_forward.1} parent=1 // pred_region
      _
    $region21: #{nmt_plan_model_forward.1} parent=1 // pred_fallthru
      _
    // Predicated region
    $region22: #{nmt_plan_model_forward.1} parent=1 // pred_check
      _
    $region23: #{nmt_plan_model_forward.1} parent=1 // pred_check_branch
      %35 = sbr.rel (0) target = $region25
    $region24: #{nmt_plan_model_forward.1} parent=1 // pred_region
      %s37 = ssub.s32 384, 384
      %38 = vsyncadd [#allocation3], %s37
      %s39 = sshll.u32 [#allocation2], 4
      %s40 = int_to_ptr.vmem [resolvable:$true] %s39
      %45 = dma.hbm_to_vmem [thread:$0]  %s5, 384, %s40, [#allocation3], 64, 64, 4
    $region25: #{nmt_plan_model_forward.1} parent=1 // pred_fallthru
      _
    // Predicated region
    $region26: #{nmt_plan_model_forward.1} parent=1 // pred_check
      _
    $region27: #{nmt_plan_model_forward.1} parent=1 // pred_check_branch
      %47 = sbr.rel (0) target = $region29
    $region28: #{nmt_plan_model_forward.1} parent=1 // pred_region
      _
    $region29: #{nmt_plan_model_forward.1} parent=1 // pred_fallthru
      _
    // Predicated region
    $region30: #{nmt_plan_model_forward.1} parent=1 // pred_check
      _
    $region31: #{nmt_plan_model_forward.1} parent=1 // pred_check_branch
      %49 = sbr.rel (0) target = $region33
    $region32: #{nmt_plan_model_forward.1} parent=1 // pred_region
      _
    $region33: #{nmt_plan_model_forward.1} parent=1 // pred_fallthru
      _
    // Predicated region
    $region34: #{nmt_plan_model_forward.1} parent=1 // pred_check
      _
    $region35: #{nmt_plan_model_forward.1} parent=1 // pred_check_branch
      %51 = sbr.rel (0) target = $region37
    $region36: #{nmt_plan_model_forward.1} parent=1 // pred_region
      _
    $region37: #{nmt_plan_model_forward.1} parent=1 // pred_fallthru
      _
    // Predicated region
    $region38: #{nmt_plan_model_forward.1} parent=1 // pred_check
      _
    $region39: #{nmt_plan_model_forward.1} parent=1 // pred_check_branch
      %53 = sbr.rel (0) target = $region41
    $region40: #{nmt_plan_model_forward.1} parent=1 // pred_region
      _
    $region41: #{nmt_plan_model_forward.1} parent=1 // pred_fallthru
      _
    // Predicated region
    $region42: #{nmt_plan_model_forward.1} parent=1 // pred_check
      _
    $region43: #{nmt_plan_model_forward.1} parent=1 // pred_check_branch
      %55 = sbr.rel (0) target = $region45
    $region44: #{nmt_plan_model_forward.1} parent=1 // pred_region
      _
    $region45: #{nmt_plan_model_forward.1} parent=1 // pred_fallthru
      _
    // Predicated region
    $region46: #{nmt_plan_model_forward.1} parent=1 // pred_check
      _
    $region47: #{nmt_plan_model_forward.1} parent=1 // pred_check_branch
      %57 = sbr.rel (0) target = $region49
    $region48: #{nmt_plan_model_forward.1} parent=1 // pred_region
      _
    $region49: #{nmt_plan_model_forward.1} parent=1 // pred_fallthru
      _
    // Predicated region
    $region50: #{nmt_plan_model_forward.1} parent=1 // pred_check
      _
    $region51: #{nmt_plan_model_forward.1} parent=1 // pred_check_branch
      %59 = sbr.rel (0) target = $region53
    $region52: #{nmt_plan_model_forward.1} parent=1 // pred_region
      %s61 = ssub.s32 16, 16
      %62 = vsyncadd [#allocation5], %s61
      %s64 = sshll.u32 [#allocation4], 4
      %s65 = int_to_ptr.vmem [resolvable:$true] %s64
      %67 = dma.hbm_to_vmem [thread:$0]  %s12, 16, %s65, [#allocation5]
    $region53: #{nmt_plan_model_forward.1} parent=1 // pred_fallthru
      _
    // Predicated region
    $region54: #{nmt_plan_model_forward.1} parent=1 // pred_check
      _
    $region55: #{nmt_plan_model_forward.1} parent=1 // pred_check_branch
      %69 = sbr.rel (0) target = $region57
    $region56: #{nmt_plan_model_forward.1} parent=1 // pred_region
      %70 = dma.done [#allocation3], 384
    $region57: #{nmt_plan_model_forward.1} parent=1 // pred_fallthru
      _
    // Predicated region
    $region58: #{nmt_plan_model_forward.1} parent=1 // pred_check
      _
    $region59: #{nmt_plan_model_forward.1} parent=1 // pred_check_branch
      %72 = sbr.rel (0) target = $region61
    $region60: #{nmt_plan_model_forward.1} parent=1 // pred_region
      %73 = dma.done [#allocation5], 16
    $region61: #{nmt_plan_model_forward.1} parent=1 // pred_fallthru
      _
    %v75 = vld [vmem:[%s0] sm:$0xff]
    %v76 = vld [vmem:[%s0 + $0x8] sm:$0xff]
    %v77 = vld [vmem:[%s0 + $0x10] sm:$0xff]
    %v78 = vld [vmem:[%s0 + $0x18] sm:$0xff]
    %v79 = vld [vmem:[%s0 + $0x20] sm:$0xff]
    %v80 = vld [vmem:[%s0 + $0x28] sm:$0xff]
    %v81 = vld [vmem:[%s0 + $0x30] sm:$0xff]
    %v82 = vld [vmem:[%s0 + $0x38] sm:$0xff]
    %v83 = vld [vmem:[%s0 + $0x40] sm:$0xff]
    %v84 = vld [vmem:[%s0 + $0x48] sm:$0xff]
    %v85 = vld [vmem:[%s0 + $0x50] sm:$0xff]
    %v86 = vld [vmem:[%s0 + $0x58] sm:$0xff]
    %v87 = vld [vmem:[%s0 + $0x60] sm:$0xff]
    %v88 = vld [vmem:[%s0 + $0x68] sm:$0xff]
    %v89 = vld [vmem:[%s0 + $0x70] sm:$0xff]
    %v90 = vld [vmem:[%s0 + $0x78] sm:$0xff]
    %v91 = vld [vmem:[%s0 + $0x80] sm:$0xff]
    %v92 = vld [vmem:[%s0 + $0x88] sm:$0xff]
    %v93 = vld [vmem:[%s0 + $0x90] sm:$0xff]
    %v94 = vld [vmem:[%s0 + $0x98] sm:$0xff]
    %v95 = vld [vmem:[%s0 + $0xa0] sm:$0xff]
    %v96 = vld [vmem:[%s0 + $0xa8] sm:$0xff]
    %v97 = vld [vmem:[%s0 + $0xb0] sm:$0xff]
    %v98 = vld [vmem:[%s0 + $0xb8] sm:$0xff]
    %v99 = vld [vmem:[%s0 + $0xc0] sm:$0xff]
    %v100 = vld [vmem:[%s0 + $0xc8] sm:$0xff]
    %v101 = vld [vmem:[%s0 + $0xd0] sm:$0xff]
    %v102 = vld [vmem:[%s0 + $0xd8] sm:$0xff]
    %v103 = vld [vmem:[%s0 + $0xe0] sm:$0xff]
    %v104 = vld [vmem:[%s0 + $0xe8] sm:$0xff]
    %v105 = vld [vmem:[%s0 + $0xf0] sm:$0xff]
    %v106 = vld [vmem:[%s0 + $0xf8] sm:$0xff]
    %v107 = vlaneseq
    %v108 = vand.u32 %v107, 127
    %109 = vset.pattern.permute.xlu0 0
    %110 = vperm.xlu0 %109, %v75
    %v111 = vpop.permute.xlu0 %110
    %112 = vset.pattern.permute.xlu0 0
    %113 = vperm.xlu0 %112, %v76
    %v114 = vpop.permute.xlu0 %113
    %115 = vset.pattern.permute.xlu0 0
    %116 = vperm.xlu0 %115, %v77
    %v117 = vpop.permute.xlu0 %116
    %118 = vset.pattern.permute.xlu0 0
    %119 = vperm.xlu0 %118, %v78
    %v120 = vpop.permute.xlu0 %119
    %121 = vset.pattern.permute.xlu0 0
    %122 = vperm.xlu0 %121, %v79
    %v123 = vpop.permute.xlu0 %122
    %124 = vset.pattern.permute.xlu0 0
    %125 = vperm.xlu0 %124, %v80
    %v126 = vpop.permute.xlu0 %125
    %127 = vset.pattern.permute.xlu0 0
    %128 = vperm.xlu0 %127, %v81
    %v129 = vpop.permute.xlu0 %128
    %130 = vset.pattern.permute.xlu0 0
    %131 = vperm.xlu0 %130, %v82
    %v132 = vpop.permute.xlu0 %131
    %133 = vset.pattern.permute.xlu0 0
    %134 = vperm.xlu0 %133, %v83
    %v135 = vpop.permute.xlu0 %134
    %136 = vset.pattern.permute.xlu0 0
    %137 = vperm.xlu0 %136, %v84
    %v138 = vpop.permute.xlu0 %137
    %139 = vset.pattern.permute.xlu0 0
    %140 = vperm.xlu0 %139, %v85
    %v141 = vpop.permute.xlu0 %140
    %142 = vset.pattern.permute.xlu0 0
    %143 = vperm.xlu0 %142, %v86
    %v144 = vpop.permute.xlu0 %143
    %145 = vset.pattern.permute.xlu0 0
    %146 = vperm.xlu0 %145, %v87
    %v147 = vpop.permute.xlu0 %146
    %148 = vset.pattern.permute.xlu0 0
    %149 = vperm.xlu0 %148, %v88
    %v150 = vpop.permute.xlu0 %149
    %151 = vset.pattern.permute.xlu0 0
    %152 = vperm.xlu0 %151, %v89
    %v153 = vpop.permute.xlu0 %152
    %154 = vset.pattern.permute.xlu0 0
    %155 = vperm.xlu0 %154, %v90
    %v156 = vpop.permute.xlu0 %155
    %157 = vset.pattern.permute.xlu0 0
    %158 = vperm.xlu0 %157, %v91
    %v159 = vpop.permute.xlu0 %158
    %160 = vset.pattern.permute.xlu0 0
    %161 = vperm.xlu0 %160, %v92
    %v162 = vpop.permute.xlu0 %161
    %163 = vset.pattern.permute.xlu0 0
    %164 = vperm.xlu0 %163, %v93
    %v165 = vpop.permute.xlu0 %164
    %166 = vset.pattern.permute.xlu0 0
    %167 = vperm.xlu0 %166, %v94
    %v168 = vpop.permute.xlu0 %167
    %169 = vset.pattern.permute.xlu0 0
    %170 = vperm.xlu0 %169, %v95
    %v171 = vpop.permute.xlu0 %170
    %172 = vset.pattern.permute.xlu0 0
    %173 = vperm.xlu0 %172, %v96
    %v174 = vpop.permute.xlu0 %173
    %175 = vset.pattern.permute.xlu0 0
    %176 = vperm.xlu0 %175, %v97
    %v177 = vpop.permute.xlu0 %176
    %178 = vset.pattern.permute.xlu0 0
    %179 = vperm.xlu0 %178, %v98
    %v180 = vpop.permute.xlu0 %179
    %181 = vset.pattern.permute.xlu0 0
    %182 = vperm.xlu0 %181, %v99
    %v183 = vpop.permute.xlu0 %182
    %184 = vset.pattern.permute.xlu0 0
    %185 = vperm.xlu0 %184, %v100
    %v186 = vpop.permute.xlu0 %185
    %187 = vset.pattern.permute.xlu0 0
    %188 = vperm.xlu0 %187, %v101
    %v189 = vpop.permute.xlu0 %188
    %190 = vset.pattern.permute.xlu0 0
    %191 = vperm.xlu0 %190, %v102
    %v192 = vpop.permute.xlu0 %191
    %193 = vset.pattern.permute.xlu0 0
    %194 = vperm.xlu0 %193, %v103
    %v195 = vpop.permute.xlu0 %194
    %196 = vset.pattern.permute.xlu0 0
    %197 = vperm.xlu0 %196, %v104
    %v198 = vpop.permute.xlu0 %197
    %199 = vset.pattern.permute.xlu0 0
    %200 = vperm.xlu0 %199, %v105
    %v201 = vpop.permute.xlu0 %200
    %202 = vset.pattern.permute.xlu0 0
    %203 = vperm.xlu0 %202, %v106
    %v204 = vpop.permute.xlu0 %203
    %vm205 = vcmp.eq.s32.totalorder %v108, %v111
    %vm206 = vcmp.eq.s32.totalorder %v108, %v114
    %vm207 = vcmp.eq.s32.totalorder %v108, %v117
    %vm208 = vcmp.eq.s32.totalorder %v108, %v120
    %vm209 = vcmp.eq.s32.totalorder %v108, %v123
    %vm210 = vcmp.eq.s32.totalorder %v108, %v126
    %vm211 = vcmp.eq.s32.totalorder %v108, %v129
    %vm212 = vcmp.eq.s32.totalorder %v108, %v132
    %vm213 = vcmp.eq.s32.totalorder %v108, %v135
    %vm214 = vcmp.eq.s32.totalorder %v108, %v138
    %vm215 = vcmp.eq.s32.totalorder %v108, %v141
    %vm216 = vcmp.eq.s32.totalorder %v108, %v144
    %vm217 = vcmp.eq.s32.totalorder %v108, %v147
    %vm218 = vcmp.eq.s32.totalorder %v108, %v150
    %vm219 = vcmp.eq.s32.totalorder %v108, %v153
    %vm220 = vcmp.eq.s32.totalorder %v108, %v156
    %vm221 = vcmp.eq.s32.totalorder %v108, %v159
    %vm222 = vcmp.eq.s32.totalorder %v108, %v162
    %vm223 = vcmp.eq.s32.totalorder %v108, %v165
    %vm224 = vcmp.eq.s32.totalorder %v108, %v168
    %vm225 = vcmp.eq.s32.totalorder %v108, %v171
    %vm226 = vcmp.eq.s32.totalorder %v108, %v174
    %vm227 = vcmp.eq.s32.totalorder %v108, %v177
    %vm228 = vcmp.eq.s32.totalorder %v108, %v180
    %vm229 = vcmp.eq.s32.totalorder %v108, %v183
    %vm230 = vcmp.eq.s32.totalorder %v108, %v186
    %vm231 = vcmp.eq.s32.totalorder %v108, %v189
    %vm232 = vcmp.eq.s32.totalorder %v108, %v192
    %vm233 = vcmp.eq.s32.totalorder %v108, %v195
    %vm234 = vcmp.eq.s32.totalorder %v108, %v198
    %vm235 = vcmp.eq.s32.totalorder %v108, %v201
    %vm236 = vcmp.eq.s32.totalorder %v108, %v204
    %v237 = vsel %vm205, 1, 0
    %v238 = vsel %vm206, 1, 0
    %v239 = vsel %vm207, 1, 0
    %v240 = vsel %vm208, 1, 0
    %v241 = vsel %vm209, 1, 0
    %v242 = vsel %vm210, 1, 0
    %v243 = vsel %vm211, 1, 0
    %v244 = vsel %vm212, 1, 0
    %v245 = vsel %vm213, 1, 0
    %v246 = vsel %vm214, 1, 0
    %v247 = vsel %vm215, 1, 0
    %v248 = vsel %vm216, 1, 0
    %v249 = vsel %vm217, 1, 0
    %v250 = vsel %vm218, 1, 0
    %v251 = vsel %vm219, 1, 0
    %v252 = vsel %vm220, 1, 0
    %v253 = vsel %vm221, 1, 0
    %v254 = vsel %vm222, 1, 0
    %v255 = vsel %vm223, 1, 0
    %v256 = vsel %vm224, 1, 0
    %v257 = vsel %vm225, 1, 0
    %v258 = vsel %vm226, 1, 0
    %v259 = vsel %vm227, 1, 0
    %v260 = vsel %vm228, 1, 0
    %v261 = vsel %vm229, 1, 0
    %v262 = vsel %vm230, 1, 0
    %v263 = vsel %vm231, 1, 0
    %v264 = vsel %vm232, 1, 0
    %v265 = vsel %vm233, 1, 0
    %v266 = vsel %vm234, 1, 0
    %v267 = vsel %vm235, 1, 0
    %v268 = vsel %vm236, 1, 0
    %v269 = vcvt.s32.f32 %v237
    %v270 = vcvt.s32.f32 %v238
    %v271 = vcvt.s32.f32 %v239
    %v272 = vcvt.s32.f32 %v240
    %v273 = vcvt.s32.f32 %v241
    %v274 = vcvt.s32.f32 %v242
    %v275 = vcvt.s32.f32 %v243
    %v276 = vcvt.s32.f32 %v244
    %v277 = vcvt.s32.f32 %v245
    %v278 = vcvt.s32.f32 %v246
    %v279 = vcvt.s32.f32 %v247
    %v280 = vcvt.s32.f32 %v248
    %v281 = vcvt.s32.f32 %v249
    %v282 = vcvt.s32.f32 %v250
    %v283 = vcvt.s32.f32 %v251
    %v284 = vcvt.s32.f32 %v252
    %v285 = vcvt.s32.f32 %v253
    %v286 = vcvt.s32.f32 %v254
    %v287 = vcvt.s32.f32 %v255
    %v288 = vcvt.s32.f32 %v256
    %v289 = vcvt.s32.f32 %v257
    %v290 = vcvt.s32.f32 %v258
    %v291 = vcvt.s32.f32 %v259
    %v292 = vcvt.s32.f32 %v260
    %v293 = vcvt.s32.f32 %v261
    %v294 = vcvt.s32.f32 %v262
    %v295 = vcvt.s32.f32 %v263
    %v296 = vcvt.s32.f32 %v264
    %v297 = vcvt.s32.f32 %v265
    %v298 = vcvt.s32.f32 %v266
    %v299 = vcvt.s32.f32 %v267
    %v300 = vcvt.s32.f32 %v268
    %v301 = vpack.c.bf16 %v270, %v269
    %v302 = vpack.c.bf16 %v272, %v271
    %v303 = vpack.c.bf16 %v274, %v273
    %v304 = vpack.c.bf16 %v276, %v275
    %v305 = vpack.c.bf16 %v278, %v277
    %v306 = vpack.c.bf16 %v280, %v279
    %v307 = vpack.c.bf16 %v282, %v281
    %v308 = vpack.c.bf16 %v284, %v283
    %v309 = vpack.c.bf16 %v286, %v285
    %v310 = vpack.c.bf16 %v288, %v287
    %v311 = vpack.c.bf16 %v290, %v289
    %v312 = vpack.c.bf16 %v292, %v291
    %v313 = vpack.c.bf16 %v294, %v293
    %v314 = vpack.c.bf16 %v296, %v295
    %v315 = vpack.c.bf16 %v298, %v297
    %v316 = vpack.c.bf16 %v300, %v299
    %v317 = vld [vmem:[%s4] sm:$0xf]
    %v318 = vld [vmem:[%s4 + $0x4] sm:$0xf]
    %v319 = vld [vmem:[%s4 + $0x8] sm:$0xf]
    %v320 = vld [vmem:[%s4 + $0xc] sm:$0xf]
    %v321 = vld [vmem:[%s4 + $0x10] sm:$0xf]
    %v322 = vld [vmem:[%s4 + $0x14] sm:$0xf]
    %v323 = vld [vmem:[%s4 + $0x18] sm:$0xf]
    %v324 = vld [vmem:[%s4 + $0x1c] sm:$0xf]
    %v333 = vunpack.c.l.b16 %v317
    %v334 = vunpack.c.l.b16 %v318
    %v335 = vunpack.c.l.b16 %v319
    %v336 = vunpack.c.l.b16 %v320
    %v337 = vunpack.c.l.b16 %v321
    %v338 = vunpack.c.l.b16 %v322
    %v339 = vunpack.c.l.b16 %v323
    %v340 = vunpack.c.l.b16 %v324
    %v341 = vpack.c.b16 %v334, %v333
    %v342 = vpack.c.b16 %v336, %v335
    %v343 = vpack.c.b16 %v338, %v337
    %v344 = vpack.c.b16 %v340, %v339
    %vm349 = vcmask 523264
    %v351 = vsel %vm349, %v301, 0
    %v354 = vsel %vm349, %v302, 0
    %v357 = vsel %vm349, %v303, 0
    %v360 = vsel %vm349, %v304, 0
    %v363 = vsel %vm349, %v305, 0
    %v366 = vsel %vm349, %v306, 0
    %v369 = vsel %vm349, %v307, 0
    %v372 = vsel %vm349, %v308, 0
    %v375 = vsel %vm349, %v309, 0
    %v378 = vsel %vm349, %v310, 0
    %v381 = vsel %vm349, %v311, 0
    %v384 = vsel %vm349, %v312, 0
    %v387 = vsel %vm349, %v313, 0
    %v390 = vsel %vm349, %v314, 0
    %v393 = vsel %vm349, %v315, 0
    %v396 = vsel %vm349, %v316, 0
    %398 = vmatprep.subr.bf16.mxu0 0
    %399 = vmatpush1.bf16.msra.mxu0 0
    %400 = vmatprep.subr.bf16.mxu0 0
    %401 = vmatpush1.bf16.msra.mxu0 0
    %402 = vmatprep.subr.bf16.mxu0 0
    %403 = vmatpush1.bf16.msra.mxu0 0
    %404 = vmatprep.subr.bf16.mxu0 0
    %405 = vmatpush1.bf16.msra.mxu0 0
    %406 = vmatprep.subr.bf16.mxu0 0
    %407 = vmatpush1.bf16.msra.mxu0 %v344
    %408 = vmatprep.subr.bf16.mxu0 0
    %409 = vmatpush1.bf16.msra.mxu0 %v343
    %410 = vmatprep.subr.bf16.mxu0 0
    %411 = vmatpush1.bf16.msra.mxu0 %v342
    %412 = vmatprep.subr.bf16.mxu0 0
    %413 = vmatpush1.bf16.msra.mxu0 %v341
    %414 = vmatprep.subr.bf16.mxu0 0
    %415 = vmatpush2.bf16.msra.mxu0 0
    %416 = vmatprep.subr.bf16.mxu0 0
    %417 = vmatpush2.bf16.msra.mxu0 0
    %418 = vmatprep.subr.bf16.mxu0 0
    %419 = vmatpush2.bf16.msra.mxu0 0
    %420 = vmatprep.subr.bf16.mxu0 0
    %421 = vmatpush2.bf16.msra.mxu0 0
    %422 = vmatprep.subr.bf16.mxu0 0
    %423 = vmatpush2.bf16.msra.mxu0 0
    %424 = vmatprep.subr.bf16.mxu0 0
    %425 = vmatpush2.bf16.msra.mxu0 0
    %426 = vmatprep.subr.bf16.mxu0 0
    %427 = vmatpush2.bf16.msra.mxu0 0
    %428 = vmatprep.subr.bf16.mxu0 0
    %429 = vmatpush2.bf16.msra.mxu0 0
    %430 = vmatprep.mubr.bf16.mxu0 0
    %431 = vmatmul.mubr.bf16.gmra.mxu0 %v351
    %v432 = vpop.f32.mrf.mxu0
    %v433 = vadd.f32 0.0, %v432
    %v434 = vpop.f32.mrf.mxu0
    %v435 = vpop.f32.mrf.mxu0
    %v436 = vadd.f32 0.0, %v435
    %v437 = vpop.f32.mrf.mxu0
    %438 = vmatprep.mubr.bf16.mxu0 0
    %439 = vmatmul.mubr.bf16.gmra.mxu0 %v354
    %v440 = vpop.f32.mrf.mxu0
    %v441 = vadd.f32 0.0, %v440
    %v442 = vpop.f32.mrf.mxu0
    %v443 = vpop.f32.mrf.mxu0
    %v444 = vadd.f32 0.0, %v443
    %v445 = vpop.f32.mrf.mxu0
    %446 = vmatprep.mubr.bf16.mxu0 0
    %447 = vmatmul.mubr.bf16.gmra.mxu0 %v357
    %v448 = vpop.f32.mrf.mxu0
    %v449 = vadd.f32 0.0, %v448
    %v450 = vpop.f32.mrf.mxu0
    %v451 = vpop.f32.mrf.mxu0
    %v452 = vadd.f32 0.0, %v451
    %v453 = vpop.f32.mrf.mxu0
    %454 = vmatprep.mubr.bf16.mxu0 0
    %455 = vmatmul.mubr.bf16.gmra.mxu0 %v360
    %v456 = vpop.f32.mrf.mxu0
    %v457 = vadd.f32 0.0, %v456
    %v458 = vpop.f32.mrf.mxu0
    %v459 = vpop.f32.mrf.mxu0
    %v460 = vadd.f32 0.0, %v459
    %v461 = vpop.f32.mrf.mxu0
    %462 = vmatprep.mubr.bf16.mxu0 0
    %463 = vmatmul.mubr.bf16.gmra.mxu0 %v363
    %v464 = vpop.f32.mrf.mxu0
    %v465 = vadd.f32 0.0, %v464
    %v466 = vpop.f32.mrf.mxu0
    %v467 = vpop.f32.mrf.mxu0
    %v468 = vadd.f32 0.0, %v467
    %v469 = vpop.f32.mrf.mxu0
    %470 = vmatprep.mubr.bf16.mxu0 0
    %471 = vmatmul.mubr.bf16.gmra.mxu0 %v366
    %v472 = vpop.f32.mrf.mxu0
    %v473 = vadd.f32 0.0, %v472
    %v474 = vpop.f32.mrf.mxu0
    %v475 = vpop.f32.mrf.mxu0
    %v476 = vadd.f32 0.0, %v475
    %v477 = vpop.f32.mrf.mxu0
    %478 = vmatprep.mubr.bf16.mxu0 0
    %479 = vmatmul.mubr.bf16.gmra.mxu0 %v369
    %v480 = vpop.f32.mrf.mxu0
    %v481 = vadd.f32 0.0, %v480
    %v482 = vpop.f32.mrf.mxu0
    %v483 = vpop.f32.mrf.mxu0
    %v484 = vadd.f32 0.0, %v483
    %v485 = vpop.f32.mrf.mxu0
    %486 = vmatprep.mubr.bf16.mxu0 0
    %487 = vmatmul.mubr.bf16.gmra.mxu0 %v372
    %v488 = vpop.f32.mrf.mxu0
    %v489 = vadd.f32 0.0, %v488
    %v490 = vpop.f32.mrf.mxu0
    %v491 = vpop.f32.mrf.mxu0
    %v492 = vadd.f32 0.0, %v491
    %v493 = vpop.f32.mrf.mxu0
    %494 = vmatprep.mubr.bf16.mxu0 0
    %495 = vmatmul.mubr.bf16.gmra.mxu0 %v375
    %v496 = vpop.f32.mrf.mxu0
    %v497 = vadd.f32 0.0, %v496
    %v498 = vpop.f32.mrf.mxu0
    %v499 = vpop.f32.mrf.mxu0
    %v500 = vadd.f32 0.0, %v499
    %v501 = vpop.f32.mrf.mxu0
    %502 = vmatprep.mubr.bf16.mxu0 0
    %503 = vmatmul.mubr.bf16.gmra.mxu0 %v378
    %v504 = vpop.f32.mrf.mxu0
    %v505 = vadd.f32 0.0, %v504
    %v506 = vpop.f32.mrf.mxu0
    %v507 = vpop.f32.mrf.mxu0
    %v508 = vadd.f32 0.0, %v507
    %v509 = vpop.f32.mrf.mxu0
    %510 = vmatprep.mubr.bf16.mxu0 0
    %511 = vmatmul.mubr.bf16.gmra.mxu0 %v381
    %v512 = vpop.f32.mrf.mxu0
    %v513 = vadd.f32 0.0, %v512
    %v514 = vpop.f32.mrf.mxu0
    %v515 = vpop.f32.mrf.mxu0
    %v516 = vadd.f32 0.0, %v515
    %v517 = vpop.f32.mrf.mxu0
    %518 = vmatprep.mubr.bf16.mxu0 0
    %519 = vmatmul.mubr.bf16.gmra.mxu0 %v384
    %v520 = vpop.f32.mrf.mxu0
    %v521 = vadd.f32 0.0, %v520
    %v522 = vpop.f32.mrf.mxu0
    %v523 = vpop.f32.mrf.mxu0
    %v524 = vadd.f32 0.0, %v523
    %v525 = vpop.f32.mrf.mxu0
    %526 = vmatprep.mubr.bf16.mxu0 0
    %527 = vmatmul.mubr.bf16.gmra.mxu0 %v387
    %v528 = vpop.f32.mrf.mxu0
    %v529 = vadd.f32 0.0, %v528
    %v530 = vpop.f32.mrf.mxu0
    %v531 = vpop.f32.mrf.mxu0
    %v532 = vadd.f32 0.0, %v531
    %v533 = vpop.f32.mrf.mxu0
    %534 = vmatprep.mubr.bf16.mxu0 0
    %535 = vmatmul.mubr.bf16.gmra.mxu0 %v390
    %v536 = vpop.f32.mrf.mxu0
    %v537 = vadd.f32 0.0, %v536
    %v538 = vpop.f32.mrf.mxu0
    %v539 = vpop.f32.mrf.mxu0
    %v540 = vadd.f32 0.0, %v539
    %v541 = vpop.f32.mrf.mxu0
    %542 = vmatprep.mubr.bf16.mxu0 0
    %543 = vmatmul.mubr.bf16.gmra.mxu0 %v393
    %v544 = vpop.f32.mrf.mxu0
    %v545 = vadd.f32 0.0, %v544
    %v546 = vpop.f32.mrf.mxu0
    %v547 = vpop.f32.mrf.mxu0
    %v548 = vadd.f32 0.0, %v547
    %v549 = vpop.f32.mrf.mxu0
    %550 = vmatprep.mubr.bf16.mxu0 0
    %551 = vmatmul.mubr.bf16.gmra.mxu0 %v396
    %v552 = vpop.f32.mrf.mxu0
    %v553 = vadd.f32 0.0, %v552
    %v554 = vpop.f32.mrf.mxu0
    %v555 = vpop.f32.mrf.mxu0
    %v556 = vadd.f32 0.0, %v555
    %v557 = vpop.f32.mrf.mxu0
    %558 = vdwg.mxu0
    %v559 = vpack.c.bf16 %v436, %v433
    %v560 = vpack.c.bf16 %v444, %v441
    %v561 = vpack.c.bf16 %v452, %v449
    %v562 = vpack.c.bf16 %v460, %v457
    %v563 = vpack.c.bf16 %v468, %v465
    %v564 = vpack.c.bf16 %v476, %v473
    %v565 = vpack.c.bf16 %v484, %v481
    %v566 = vpack.c.bf16 %v492, %v489
    %v567 = vpack.c.bf16 %v500, %v497
    %v568 = vpack.c.bf16 %v508, %v505
    %v569 = vpack.c.bf16 %v516, %v513
    %v570 = vpack.c.bf16 %v524, %v521
    %v571 = vpack.c.bf16 %v532, %v529
    %v572 = vpack.c.bf16 %v540, %v537
    %v573 = vpack.c.bf16 %v548, %v545
    %v574 = vpack.c.bf16 %v556, %v553
    %v575 = vld [vmem:[%s7] sm:$0xf]
    %v576 = vld [vmem:[%s7 + $0x4] sm:$0xf]
    %v577 = vld [vmem:[%s7 + $0x8] sm:$0xf]
    %v578 = vld [vmem:[%s7 + $0xc] sm:$0xf]
    %v579 = vld [vmem:[%s7 + $0x10] sm:$0xf]
    %v580 = vld [vmem:[%s7 + $0x14] sm:$0xf]
    %v581 = vld [vmem:[%s7 + $0x18] sm:$0xf]
    %v582 = vld [vmem:[%s7 + $0x1c] sm:$0xf]
    %v583 = vld [vmem:[%s7 + $0x20] sm:$0xf]
    %v584 = vld [vmem:[%s7 + $0x24] sm:$0xf]
    %v585 = vld [vmem:[%s7 + $0x28] sm:$0xf]
    %v586 = vld [vmem:[%s7 + $0x2c] sm:$0xf]
    %v587 = vld [vmem:[%s7 + $0x30] sm:$0xf]
    %v588 = vld [vmem:[%s7 + $0x34] sm:$0xf]
    %v589 = vld [vmem:[%s7 + $0x38] sm:$0xf]
    %v590 = vld [vmem:[%s7 + $0x3c] sm:$0xf]
    %v591 = vld [vmem:[%s8] sm:$0x1]
    %v593 = vlaneseq
    %v594 = vshrl.u32 %v593, 7
    %v595 = vsub.s32 0, %v594
    %v596 = vrot.slane %v591, %v595
    %v614 = vunpack.c.l.b16 %v575
    %v615 = vunpack.c.l.b16 %v576
    %v616 = vunpack.c.l.b16 %v577
    %v617 = vunpack.c.l.b16 %v578
    %v618 = vunpack.c.l.b16 %v579
    %v619 = vunpack.c.l.b16 %v580
    %v620 = vunpack.c.l.b16 %v581
    %v621 = vunpack.c.l.b16 %v582
    %v622 = vunpack.c.l.b16 %v583
    %v623 = vunpack.c.l.b16 %v584
    %v624 = vunpack.c.l.b16 %v585
    %v625 = vunpack.c.l.b16 %v586
    %v626 = vunpack.c.l.b16 %v587
    %v627 = vunpack.c.l.b16 %v588
    %v628 = vunpack.c.l.b16 %v589
    %v629 = vunpack.c.l.b16 %v590
    %v630 = vpack.c.b16 %v615, %v614
    %v631 = vpack.c.b16 %v617, %v616
    %v632 = vpack.c.b16 %v619, %v618
    %v633 = vpack.c.b16 %v621, %v620
    %v634 = vpack.c.b16 %v623, %v622
    %v635 = vpack.c.b16 %v625, %v624
    %v636 = vpack.c.b16 %v627, %v626
    %v637 = vpack.c.b16 %v629, %v628
    %646 = vmatprep.subr.bf16.mxu0 0
    %647 = vmatpush1.bf16.msra.mxu0 %v637
    %648 = vmatprep.subr.bf16.mxu0 0
    %649 = vmatpush1.bf16.msra.mxu0 %v636
    %650 = vmatprep.subr.bf16.mxu0 0
    %651 = vmatpush1.bf16.msra.mxu0 %v635
    %652 = vmatprep.subr.bf16.mxu0 0
    %653 = vmatpush1.bf16.msra.mxu0 %v634
    %654 = vmatprep.subr.bf16.mxu0 0
    %655 = vmatpush1.bf16.msra.mxu0 %v633
    %656 = vmatprep.subr.bf16.mxu0 0
    %657 = vmatpush1.bf16.msra.mxu0 %v632
    %658 = vmatprep.subr.bf16.mxu0 0
    %659 = vmatpush1.bf16.msra.mxu0 %v631
    %660 = vmatprep.subr.bf16.mxu0 0
    %661 = vmatpush1.bf16.msra.mxu0 %v630
    %662 = vmatprep.subr.bf16.mxu0 0
    %663 = vmatpush2.bf16.msra.mxu0 0
    %664 = vmatprep.subr.bf16.mxu0 0
    %665 = vmatpush2.bf16.msra.mxu0 0
    %666 = vmatprep.subr.bf16.mxu0 0
    %667 = vmatpush2.bf16.msra.mxu0 0
    %668 = vmatprep.subr.bf16.mxu0 0
    %669 = vmatpush2.bf16.msra.mxu0 0
    %670 = vmatprep.subr.bf16.mxu0 0
    %671 = vmatpush2.bf16.msra.mxu0 0
    %672 = vmatprep.subr.bf16.mxu0 0
    %673 = vmatpush2.bf16.msra.mxu0 0
    %674 = vmatprep.subr.bf16.mxu0 0
    %675 = vmatpush2.bf16.msra.mxu0 0
    %676 = vmatprep.subr.bf16.mxu0 0
    %677 = vmatpush2.bf16.msra.mxu0 0
    %678 = vmatprep.mubr.bf16.mxu0 0
    %679 = vmatmul.mubr.bf16.gmra.mxu0 %v559
    %v680 = vpop.f32.mrf.mxu0
    %v681 = vadd.f32 %v596, %v680
    %v682 = vpop.f32.mrf.mxu0
    %v683 = vpop.f32.mrf.mxu0
    %v684 = vadd.f32 %v596, %v683
    %v685 = vpop.f32.mrf.mxu0
    %686 = vmatprep.mubr.bf16.mxu0 0
    %687 = vmatmul.mubr.bf16.gmra.mxu0 %v560
    %v688 = vpop.f32.mrf.mxu0
    %v689 = vadd.f32 %v596, %v688
    %v690 = vpop.f32.mrf.mxu0
    %v691 = vpop.f32.mrf.mxu0
    %v692 = vadd.f32 %v596, %v691
    %v693 = vpop.f32.mrf.mxu0
    %694 = vmatprep.mubr.bf16.mxu0 0
    %695 = vmatmul.mubr.bf16.gmra.mxu0 %v561
    %v696 = vpop.f32.mrf.mxu0
    %v697 = vadd.f32 %v596, %v696
    %v698 = vpop.f32.mrf.mxu0
    %v699 = vpop.f32.mrf.mxu0
    %v700 = vadd.f32 %v596, %v699
    %v701 = vpop.f32.mrf.mxu0
    %702 = vmatprep.mubr.bf16.mxu0 0
    %703 = vmatmul.mubr.bf16.gmra.mxu0 %v562
    %v704 = vpop.f32.mrf.mxu0
    %v705 = vadd.f32 %v596, %v704
    %v706 = vpop.f32.mrf.mxu0
    %v707 = vpop.f32.mrf.mxu0
    %v708 = vadd.f32 %v596, %v707
    %v709 = vpop.f32.mrf.mxu0
    %710 = vmatprep.mubr.bf16.mxu0 0
    %711 = vmatmul.mubr.bf16.gmra.mxu0 %v563
    %v712 = vpop.f32.mrf.mxu0
    %v713 = vadd.f32 %v596, %v712
    %v714 = vpop.f32.mrf.mxu0
    %v715 = vpop.f32.mrf.mxu0
    %v716 = vadd.f32 %v596, %v715
    %v717 = vpop.f32.mrf.mxu0
    %718 = vmatprep.mubr.bf16.mxu0 0
    %719 = vmatmul.mubr.bf16.gmra.mxu0 %v564
    %v720 = vpop.f32.mrf.mxu0
    %v721 = vadd.f32 %v596, %v720
    %v722 = vpop.f32.mrf.mxu0
    %v723 = vpop.f32.mrf.mxu0
    %v724 = vadd.f32 %v596, %v723
    %v725 = vpop.f32.mrf.mxu0
    %726 = vmatprep.mubr.bf16.mxu0 0
    %727 = vmatmul.mubr.bf16.gmra.mxu0 %v565
    %v728 = vpop.f32.mrf.mxu0
    %v729 = vadd.f32 %v596, %v728
    %v730 = vpop.f32.mrf.mxu0
    %v731 = vpop.f32.mrf.mxu0
    %v732 = vadd.f32 %v596, %v731
    %v733 = vpop.f32.mrf.mxu0
    %734 = vmatprep.mubr.bf16.mxu0 0
    %735 = vmatmul.mubr.bf16.gmra.mxu0 %v566
    %v736 = vpop.f32.mrf.mxu0
    %v737 = vadd.f32 %v596, %v736
    %v738 = vpop.f32.mrf.mxu0
    %v739 = vpop.f32.mrf.mxu0
    %v740 = vadd.f32 %v596, %v739
    %v741 = vpop.f32.mrf.mxu0
    %742 = vmatprep.mubr.bf16.mxu0 0
    %743 = vmatmul.mubr.bf16.gmra.mxu0 %v567
    %v744 = vpop.f32.mrf.mxu0
    %v745 = vadd.f32 %v596, %v744
    %v746 = vpop.f32.mrf.mxu0
    %v747 = vpop.f32.mrf.mxu0
    %v748 = vadd.f32 %v596, %v747
    %v749 = vpop.f32.mrf.mxu0
    %750 = vmatprep.mubr.bf16.mxu0 0
    %751 = vmatmul.mubr.bf16.gmra.mxu0 %v568
    %v752 = vpop.f32.mrf.mxu0
    %v753 = vadd.f32 %v596, %v752
    %v754 = vpop.f32.mrf.mxu0
    %v755 = vpop.f32.mrf.mxu0
    %v756 = vadd.f32 %v596, %v755
    %v757 = vpop.f32.mrf.mxu0
    %758 = vmatprep.mubr.bf16.mxu0 0
    %759 = vmatmul.mubr.bf16.gmra.mxu0 %v569
    %v760 = vpop.f32.mrf.mxu0
    %v761 = vadd.f32 %v596, %v760
    %v762 = vpop.f32.mrf.mxu0
    %v763 = vpop.f32.mrf.mxu0
    %v764 = vadd.f32 %v596, %v763
    %v765 = vpop.f32.mrf.mxu0
    %766 = vmatprep.mubr.bf16.mxu0 0
    %767 = vmatmul.mubr.bf16.gmra.mxu0 %v570
    %v768 = vpop.f32.mrf.mxu0
    %v769 = vadd.f32 %v596, %v768
    %v770 = vpop.f32.mrf.mxu0
    %v771 = vpop.f32.mrf.mxu0
    %v772 = vadd.f32 %v596, %v771
    %v773 = vpop.f32.mrf.mxu0
    %774 = vmatprep.mubr.bf16.mxu0 0
    %775 = vmatmul.mubr.bf16.gmra.mxu0 %v571
    %v776 = vpop.f32.mrf.mxu0
    %v777 = vadd.f32 %v596, %v776
    %v778 = vpop.f32.mrf.mxu0
    %v779 = vpop.f32.mrf.mxu0
    %v780 = vadd.f32 %v596, %v779
    %v781 = vpop.f32.mrf.mxu0
    %782 = vmatprep.mubr.bf16.mxu0 0
    %783 = vmatmul.mubr.bf16.gmra.mxu0 %v572
    %v784 = vpop.f32.mrf.mxu0
    %v785 = vadd.f32 %v596, %v784
    %v786 = vpop.f32.mrf.mxu0
    %v787 = vpop.f32.mrf.mxu0
    %v788 = vadd.f32 %v596, %v787
    %v789 = vpop.f32.mrf.mxu0
    %790 = vmatprep.mubr.bf16.mxu0 0
    %791 = vmatmul.mubr.bf16.gmra.mxu0 %v573
    %v792 = vpop.f32.mrf.mxu0
    %v793 = vadd.f32 %v596, %v792
    %v794 = vpop.f32.mrf.mxu0
    %v795 = vpop.f32.mrf.mxu0
    %v796 = vadd.f32 %v596, %v795
    %v797 = vpop.f32.mrf.mxu0
    %798 = vmatprep.mubr.bf16.mxu0 0
    %799 = vmatmul.mubr.bf16.gmra.mxu0 %v574
    %v800 = vpop.f32.mrf.mxu0
    %v801 = vadd.f32 %v596, %v800
    %v802 = vpop.f32.mrf.mxu0
    %v803 = vpop.f32.mrf.mxu0
    %v804 = vadd.f32 %v596, %v803
    %v805 = vpop.f32.mrf.mxu0
    %806 = vdwg.mxu0
    %v807 = vtanh.pop %v681
    %v808 = vtanh.pop %v684
    %v809 = vtanh.pop %v689
    %v810 = vtanh.pop %v692
    %v811 = vtanh.pop %v697
    %v812 = vtanh.pop %v700
    %v813 = vtanh.pop %v705
    %v814 = vtanh.pop %v708
    %v815 = vtanh.pop %v713
    %v816 = vtanh.pop %v716
    %v817 = vtanh.pop %v721
    %v818 = vtanh.pop %v724
    %v819 = vtanh.pop %v729
    %v820 = vtanh.pop %v732
    %v821 = vtanh.pop %v737
    %v822 = vtanh.pop %v740
    %v823 = vtanh.pop %v745
    %v824 = vtanh.pop %v748
    %v825 = vtanh.pop %v753
    %v826 = vtanh.pop %v756
    %v827 = vtanh.pop %v761
    %v828 = vtanh.pop %v764
    %v829 = vtanh.pop %v769
    %v830 = vtanh.pop %v772
    %v831 = vtanh.pop %v777
    %v832 = vtanh.pop %v780
    %v833 = vtanh.pop %v785
    %v834 = vtanh.pop %v788
    %v835 = vtanh.pop %v793
    %v836 = vtanh.pop %v796
    %v837 = vtanh.pop %v801
    %v838 = vtanh.pop %v804
    %v839 = vpack.c.bf16 %v808, %v807
    %v840 = vpack.c.bf16 %v810, %v809
    %v841 = vpack.c.bf16 %v812, %v811
    %v842 = vpack.c.bf16 %v814, %v813
    %v843 = vpack.c.bf16 %v816, %v815
    %v844 = vpack.c.bf16 %v818, %v817
    %v845 = vpack.c.bf16 %v820, %v819
    %v846 = vpack.c.bf16 %v822, %v821
    %v847 = vpack.c.bf16 %v824, %v823
    %v848 = vpack.c.bf16 %v826, %v825
    %v849 = vpack.c.bf16 %v828, %v827
    %v850 = vpack.c.bf16 %v830, %v829
    %v851 = vpack.c.bf16 %v832, %v831
    %v852 = vpack.c.bf16 %v834, %v833
    %v853 = vpack.c.bf16 %v836, %v835
    %v854 = vpack.c.bf16 %v838, %v837
    %v855 = vld [vmem:[%s3] sm:$0x1]
    %v856 = vld [vmem:[%s3 + $0x1] sm:$0x1]
    %857 = vset.pattern.permute.xlu0 0
    %858 = vperm.xlu0 %857, %v855
    %v859 = vpop.permute.xlu0 %858
    %v860 = vlaneseq
    %v861 = vshrl.u32 %v860, 7
    %v862 = vsub.s32 0, %v861
    %v863 = vrot.slane %v859, %v862
    %864 = vset.pattern.permute.xlu0 0
    %865 = vperm.xlu0 %864, %v856
    %v866 = vpop.permute.xlu0 %865
    %v867 = vlaneseq
    %v868 = vshrl.u32 %v867, 7
    %v869 = vsub.s32 0, %v868
    %v870 = vrot.slane %v866, %v869
    %vm871 = vcmp.lt.s32.totalorder %v108, %v863
    %vm872 = vcmp.lt.s32.totalorder %v108, %v870
    %v873 = vsel %vm871, 1, 0
    %v874 = vsel %vm872, 1, 0
    %v875 = vcvt.s32.f32 %v873
    %v876 = vcvt.s32.f32 %v874
    %v877 = vpack.c.bf16 %v875, %v875
    %v878 = vpack.c.bf16 %v876, %v876
    %879 = vmatprep.subr.bf16.mxu0 0
    %880 = vmatpush1.bf16.msra.mxu0 %v846
    %881 = vmatprep.subr.bf16.mxu0 0
    %882 = vmatpush1.bf16.msra.mxu0 %v845
    %883 = vmatprep.subr.bf16.mxu0 0
    %884 = vmatpush1.bf16.msra.mxu0 %v844
    %885 = vmatprep.subr.bf16.mxu0 0
    %886 = vmatpush1.bf16.msra.mxu0 %v843
    %887 = vmatprep.subr.bf16.mxu0 0
    %888 = vmatpush1.bf16.msra.mxu0 %v842
    %889 = vmatprep.subr.bf16.mxu0 0
    %890 = vmatpush1.bf16.msra.mxu0 %v841
    %891 = vmatprep.subr.bf16.mxu0 0
    %892 = vmatpush1.bf16.msra.mxu0 %v840
    %893 = vmatprep.subr.bf16.mxu0 0
    %894 = vmatpush1.bf16.msra.mxu0 %v839
    %895 = vmatprep.subr.bf16.mxu0 0
    %896 = vmatpush2.bf16.msra.mxu0 0
    %897 = vmatprep.subr.bf16.mxu0 0
    %898 = vmatpush2.bf16.msra.mxu0 0
    %899 = vmatprep.subr.bf16.mxu0 0
    %900 = vmatpush2.bf16.msra.mxu0 0
    %901 = vmatprep.subr.bf16.mxu0 0
    %902 = vmatpush2.bf16.msra.mxu0 0
    %903 = vmatprep.subr.bf16.mxu0 0
    %904 = vmatpush2.bf16.msra.mxu0 0
    %905 = vmatprep.subr.bf16.mxu0 0
    %906 = vmatpush2.bf16.msra.mxu0 0
    %907 = vmatprep.subr.bf16.mxu0 0
    %908 = vmatpush2.bf16.msra.mxu0 0
    %909 = vmatprep.subr.bf16.mxu0 0
    %910 = vmatpush2.bf16.msra.mxu0 0
    %911 = vmatprep.mubr.bf16.mxu0 0
    %912 = vmatmul.mubr.bf16.gmra.mxu0 %v877
    %v913 = vpop.f32.mrf.mxu0
    %v914 = vadd.f32 0.0, %v913
    %v915 = vpop.f32.mrf.mxu0
    %v916 = vpop.f32.mrf.mxu0
    %v917 = vpop.f32.mrf.mxu0
    %918 = vdwg.mxu0
    %919 = vmatprep.subr.bf16.mxu0 0
    %920 = vmatpush1.bf16.msra.mxu0 %v854
    %921 = vmatprep.subr.bf16.mxu0 0
    %922 = vmatpush1.bf16.msra.mxu0 %v853
    %923 = vmatprep.subr.bf16.mxu0 0
    %924 = vmatpush1.bf16.msra.mxu0 %v852
    %925 = vmatprep.subr.bf16.mxu0 0
    %926 = vmatpush1.bf16.msra.mxu0 %v851
    %927 = vmatprep.subr.bf16.mxu0 0
    %928 = vmatpush1.bf16.msra.mxu0 %v850
    %929 = vmatprep.subr.bf16.mxu0 0
    %930 = vmatpush1.bf16.msra.mxu0 %v849
    %931 = vmatprep.subr.bf16.mxu0 0
    %932 = vmatpush1.bf16.msra.mxu0 %v848
    %933 = vmatprep.subr.bf16.mxu0 0
    %934 = vmatpush1.bf16.msra.mxu0 %v847
    %935 = vmatprep.subr.bf16.mxu0 0
    %936 = vmatpush2.bf16.msra.mxu0 0
    %937 = vmatprep.subr.bf16.mxu0 0
    %938 = vmatpush2.bf16.msra.mxu0 0
    %939 = vmatprep.subr.bf16.mxu0 0
    %940 = vmatpush2.bf16.msra.mxu0 0
    %941 = vmatprep.subr.bf16.mxu0 0
    %942 = vmatpush2.bf16.msra.mxu0 0
    %943 = vmatprep.subr.bf16.mxu0 0
    %944 = vmatpush2.bf16.msra.mxu0 0
    %945 = vmatprep.subr.bf16.mxu0 0
    %946 = vmatpush2.bf16.msra.mxu0 0
    %947 = vmatprep.subr.bf16.mxu0 0
    %948 = vmatpush2.bf16.msra.mxu0 0
    %949 = vmatprep.subr.bf16.mxu0 0
    %950 = vmatpush2.bf16.msra.mxu0 0
    %951 = vmatprep.mubr.bf16.mxu0 0
    %952 = vmatmul.mubr.bf16.gmra.mxu0 %v878
    %v953 = vpop.f32.mrf.mxu0
    %v954 = vadd.f32 0.0, %v953
    %v955 = vpop.f32.mrf.mxu0
    %v956 = vpop.f32.mrf.mxu0
    %v957 = vpop.f32.mrf.mxu0
    %958 = vdwg.mxu0
    %v959 = vcvt.s32.f32 %v855
    %v960 = vcvt.s32.f32 %v856
    %v961 = vmax.f32 %v959, 1.0
    %v962 = vmax.f32 %v960, 1.0
    %v963 = vrcp.pop %v961
    %v964 = vmul.f32 1.0, %v963
    %v965 = vrcp.pop %v962
    %v966 = vmul.f32 1.0, %v965
    %968 = vset.pattern.permute.xlu0 0
    %969 = vperm.xlu0 %968, %v964
    %v970 = vpop.permute.xlu0 %969
    %v972 = vlaneseq
    %v973 = vshrl.u32 %v972, 7
    %v974 = vsub.s32 0, %v973
    %v975 = vrot.slane %v970, %v974
    %977 = vset.pattern.permute.xlu0 0
    %978 = vperm.xlu0 %977, %v966
    %v979 = vpop.permute.xlu0 %978
    %v981 = vlaneseq
    %v982 = vshrl.u32 %v981, 7
    %v983 = vsub.s32 0, %v982
    %v984 = vrot.slane %v979, %v983
    %v985 = vmul.f32 %v914, %v975
    %v986 = vmul.f32 %v954, %v984
    %v987 = vld [vmem:[%s2] sm:$0xff]
    %v988 = vld [vmem:[%s2 + $0x8] sm:$0xff]
    %v989 = vld [vmem:[%s2 + $0x10] sm:$0xff]
    %v990 = vld [vmem:[%s2 + $0x18] sm:$0xff]
    %991 = vset.pattern.permute.xlu0 0
    %992 = vperm.xlu0 %991, %v987
    %v993 = vpop.permute.xlu0 %992
    %994 = vset.pattern.permute.xlu0 0
    %995 = vperm.xlu0 %994, %v988
    %v996 = vpop.permute.xlu0 %995
    %997 = vset.pattern.permute.xlu0 0
    %998 = vperm.xlu0 %997, %v989
    %v999 = vpop.permute.xlu0 %998
    %1000 = vset.pattern.permute.xlu0 0
    %1001 = vperm.xlu0 %1000, %v990
    %v1002 = vpop.permute.xlu0 %1001
    %vm1003 = vcmp.eq.s32.totalorder %v108, %v993
    %vm1004 = vcmp.eq.s32.totalorder %v108, %v996
    %vm1005 = vcmp.eq.s32.totalorder %v108, %v999
    %vm1006 = vcmp.eq.s32.totalorder %v108, %v1002
    %v1007 = vsel %vm1003, 1, 0
    %v1008 = vsel %vm1004, 1, 0
    %v1009 = vsel %vm1005, 1, 0
    %v1010 = vsel %vm1006, 1, 0
    %v1011 = vcvt.s32.f32 %v1007
    %v1012 = vcvt.s32.f32 %v1008
    %v1013 = vcvt.s32.f32 %v1009
    %v1014 = vcvt.s32.f32 %v1010
    %v1015 = vpack.c.bf16 %v1012, %v1011
    %v1016 = vpack.c.bf16 %v1014, %v1013
    %v1017 = vld [vmem:[%s6] sm:$0xf]
    %v1018 = vld [vmem:[%s6 + $0x4] sm:$0xf]
    %v1019 = vld [vmem:[%s6 + $0x8] sm:$0xf]
    %v1020 = vld [vmem:[%s6 + $0xc] sm:$0xf]
    %v1025 = vunpack.c.l.b16 %v1017
    %v1026 = vunpack.c.l.b16 %v1018
    %v1027 = vunpack.c.l.b16 %v1019
    %v1028 = vunpack.c.l.b16 %v1020
    %v1029 = vpack.c.b16 %v1026, %v1025
    %v1030 = vpack.c.b16 %v1028, %v1027
    %vm1033 = vcmask 261120
    %v1035 = vsel %vm1033, %v1015, 0
    %v1038 = vsel %vm1033, %v1016, 0
    %1040 = vmatprep.subr.bf16.mxu0 0
    %1041 = vmatpush1.bf16.msra.mxu0 0
    %1042 = vmatprep.subr.bf16.mxu0 0
    %1043 = vmatpush1.bf16.msra.mxu0 0
    %1044 = vmatprep.subr.bf16.mxu0 0
    %1045 = vmatpush1.bf16.msra.mxu0 0
    %1046 = vmatprep.subr.bf16.mxu0 0
    %1047 = vmatpush1.bf16.msra.mxu0 0
    %1048 = vmatprep.subr.bf16.mxu0 0
    %1049 = vmatpush1.bf16.msra.mxu0 0
    %1050 = vmatprep.subr.bf16.mxu0 0
    %1051 = vmatpush1.bf16.msra.mxu0 0
    %1052 = vmatprep.subr.bf16.mxu0 0
    %1053 = vmatpush1.bf16.msra.mxu0 %v1030
    %1054 = vmatprep.subr.bf16.mxu0 0
    %1055 = vmatpush1.bf16.msra.mxu0 %v1029
    %1056 = vmatprep.subr.bf16.mxu0 0
    %1057 = vmatpush2.bf16.msra.mxu0 0
    %1058 = vmatprep.subr.bf16.mxu0 0
    %1059 = vmatpush2.bf16.msra.mxu0 0
    %1060 = vmatprep.subr.bf16.mxu0 0
    %1061 = vmatpush2.bf16.msra.mxu0 0
    %1062 = vmatprep.subr.bf16.mxu0 0
    %1063 = vmatpush2.bf16.msra.mxu0 0
    %1064 = vmatprep.subr.bf16.mxu0 0
    %1065 = vmatpush2.bf16.msra.mxu0 0
    %1066 = vmatprep.subr.bf16.mxu0 0
    %1067 = vmatpush2.bf16.msra.mxu0 0
    %1068 = vmatprep.subr.bf16.mxu0 0
    %1069 = vmatpush2.bf16.msra.mxu0 0
    %1070 = vmatprep.subr.bf16.mxu0 0
    %1071 = vmatpush2.bf16.msra.mxu0 0
    %1072 = vmatprep.mubr.bf16.mxu0 0
    %1073 = vmatmul.mubr.bf16.gmra.mxu0 %v1035
    %v1074 = vpop.f32.mrf.mxu0
    %v1075 = vadd.f32 0.0, %v1074
    %v1076 = vpop.f32.mrf.mxu0
    %v1077 = vpop.f32.mrf.mxu0
    %v1078 = vadd.f32 0.0, %v1077
    %v1079 = vpop.f32.mrf.mxu0
    %1080 = vmatprep.mubr.bf16.mxu0 0
    %1081 = vmatmul.mubr.bf16.gmra.mxu0 %v1038
    %v1082 = vpop.f32.mrf.mxu0
    %v1083 = vadd.f32 0.0, %v1082
    %v1084 = vpop.f32.mrf.mxu0
    %v1085 = vpop.f32.mrf.mxu0
    %v1086 = vadd.f32 0.0, %v1085
    %v1087 = vpop.f32.mrf.mxu0
    %1088 = vdwg.mxu0
    %v1089 = vlaneseq
    %v1090 = vshrl.u32 %v1089, 7
    %v1091 = vsub.s32 0, %v1090
    %v1092 = vrot.slane %v985, %v1091
    %v1093 = vlaneseq
    %v1094 = vshrl.u32 %v1093, 7
    %v1095 = vsub.s32 0, %v1094
    %v1096 = vrot.slane %v986, %v1095
    %v1097 = vadd.f32 %v1075, %v1092
    %v1098 = vadd.f32 %v1078, %v1092
    %v1099 = vadd.f32 %v1083, %v1096
    %v1100 = vadd.f32 %v1086, %v1096
    %v1101 = vpack.c.bf16 %v1098, %v1097
    %v1102 = vpack.c.bf16 %v1100, %v1099
    %1103 = vmatprep.subr.bf16.mxu0 0
    %1104 = vmatpush1.bf16.xpose.msra.mxu0 %v846
    %1105 = vmatprep.subr.bf16.mxu0 0
    %1106 = vmatpush1.bf16.xpose.msra.mxu0 %v845
    %1107 = vmatprep.subr.bf16.mxu0 0
    %1108 = vmatpush1.bf16.xpose.msra.mxu0 %v844
    %1109 = vmatprep.subr.bf16.mxu0 0
    %1110 = vmatpush1.bf16.xpose.msra.mxu0 %v843
    %1111 = vmatprep.subr.bf16.mxu0 0
    %1112 = vmatpush1.bf16.xpose.msra.mxu0 %v842
    %1113 = vmatprep.subr.bf16.mxu0 0
    %1114 = vmatpush1.bf16.xpose.msra.mxu0 %v841
    %1115 = vmatprep.subr.bf16.mxu0 0
    %1116 = vmatpush1.bf16.xpose.msra.mxu0 %v840
    %1117 = vmatprep.subr.bf16.mxu0 0
    %1118 = vmatpush1.bf16.xpose.msra.mxu0 %v839
    %1119 = vmatprep.subr.bf16.mxu0 0
    %1120 = vmatpush2.bf16.xpose.msra.mxu0 0
    %1121 = vmatprep.subr.bf16.mxu0 0
    %1122 = vmatpush2.bf16.xpose.msra.mxu0 0
    %1123 = vmatprep.subr.bf16.mxu0 0
    %1124 = vmatpush2.bf16.xpose.msra.mxu0 0
    %1125 = vmatprep.subr.bf16.mxu0 0
    %1126 = vmatpush2.bf16.xpose.msra.mxu0 0
    %1127 = vmatprep.subr.bf16.mxu0 0
    %1128 = vmatpush2.bf16.xpose.msra.mxu0 0
    %1129 = vmatprep.subr.bf16.mxu0 0
    %1130 = vmatpush2.bf16.xpose.msra.mxu0 0
    %1131 = vmatprep.subr.bf16.mxu0 0
    %1132 = vmatpush2.bf16.xpose.msra.mxu0 0
    %1133 = vmatprep.subr.bf16.mxu0 0
    %1134 = vmatpush2.bf16.xpose.msra.mxu0 0
    %1135 = vmatprep.mubr.bf16.mxu0 0
    %1136 = vmatmul.mubr.bf16.gmra.mxu0 %v1101
    %v1137 = vpop.f32.mrf.mxu0
    %v1138 = vadd.f32 0.0, %v1137
    %v1139 = vpop.f32.mrf.mxu0
    %v1140 = vpop.f32.mrf.mxu0
    %v1141 = vadd.f32 0.0, %v1140
    %v1142 = vpop.f32.mrf.mxu0
    %1143 = vdwg.mxu0
    %1144 = vmatprep.subr.bf16.mxu0 0
    %1145 = vmatpush1.bf16.xpose.msra.mxu0 %v854
    %1146 = vmatprep.subr.bf16.mxu0 0
    %1147 = vmatpush1.bf16.xpose.msra.mxu0 %v853
    %1148 = vmatprep.subr.bf16.mxu0 0
    %1149 = vmatpush1.bf16.xpose.msra.mxu0 %v852
    %1150 = vmatprep.subr.bf16.mxu0 0
    %1151 = vmatpush1.bf16.xpose.msra.mxu0 %v851
    %1152 = vmatprep.subr.bf16.mxu0 0
    %1153 = vmatpush1.bf16.xpose.msra.mxu0 %v850
    %1154 = vmatprep.subr.bf16.mxu0 0
    %1155 = vmatpush1.bf16.xpose.msra.mxu0 %v849
    %1156 = vmatprep.subr.bf16.mxu0 0
    %1157 = vmatpush1.bf16.xpose.msra.mxu0 %v848
    %1158 = vmatprep.subr.bf16.mxu0 0
    %1159 = vmatpush1.bf16.xpose.msra.mxu0 %v847
    %1160 = vmatprep.subr.bf16.mxu0 0
    %1161 = vmatpush2.bf16.xpose.msra.mxu0 0
    %1162 = vmatprep.subr.bf16.mxu0 0
    %1163 = vmatpush2.bf16.xpose.msra.mxu0 0
    %1164 = vmatprep.subr.bf16.mxu0 0
    %1165 = vmatpush2.bf16.xpose.msra.mxu0 0
    %1166 = vmatprep.subr.bf16.mxu0 0
    %1167 = vmatpush2.bf16.xpose.msra.mxu0 0
    %1168 = vmatprep.subr.bf16.mxu0 0
    %1169 = vmatpush2.bf16.xpose.msra.mxu0 0
    %1170 = vmatprep.subr.bf16.mxu0 0
    %1171 = vmatpush2.bf16.xpose.msra.mxu0 0
    %1172 = vmatprep.subr.bf16.mxu0 0
    %1173 = vmatpush2.bf16.xpose.msra.mxu0 0
    %1174 = vmatprep.subr.bf16.mxu0 0
    %1175 = vmatpush2.bf16.xpose.msra.mxu0 0
    %1176 = vmatprep.mubr.bf16.mxu0 0
    %1177 = vmatmul.mubr.bf16.gmra.mxu0 %v1102
    %v1178 = vpop.f32.mrf.mxu0
    %v1179 = vadd.f32 0.0, %v1178
    %v1180 = vpop.f32.mrf.mxu0
    %v1181 = vpop.f32.mrf.mxu0
    %v1182 = vadd.f32 0.0, %v1181
    %v1183 = vpop.f32.mrf.mxu0
    %1184 = vdwg.mxu0
    %v1185 = vlaneseq
    %v1186 = vshrl.u32 %v1185, 7
    %v1187 = vsub.s32 0, %v1186
    %v1188 = vrot.slane %v855, %v1187
    %v1189 = vlaneseq
    %v1190 = vshrl.u32 %v1189, 7
    %v1191 = vsub.s32 0, %v1190
    %v1192 = vrot.slane %v856, %v1191
    %1193 = vset.pattern.permute.xlu0 0
    %1194 = vperm.xlu0 %1193, %v1188
    %v1195 = vpop.permute.xlu0 %1194
    %1196 = vset.pattern.permute.xlu0 0
    %1197 = vperm.xlu0 %1196, %v1192
    %v1198 = vpop.permute.xlu0 %1197
    %vm1199 = vcmp.lt.s32.totalorder %v108, %v1195
    %vm1200 = vcmp.lt.s32.totalorder %v108, %v1198
    %v1201 = vsel %vm1199, %v1138, -1e+09
    %v1202 = vsel %vm1199, %v1141, -1e+09
    %v1203 = vsel %vm1200, %v1179, -1e+09
    %v1204 = vsel %vm1200, %v1182, -1e+09
    %1205 = vmax.xlane.f32.xlu0 %v1201
    %v1206 = vpop.xlane.xlu0 %1205
    %1207 = vmax.xlane.f32.xlu0 %v1202
    %v1208 = vpop.xlane.xlu0 %1207
    %1209 = vmax.xlane.f32.xlu0 %v1203
    %v1210 = vpop.xlane.xlu0 %1209
    %1211 = vmax.xlane.f32.xlu0 %v1204
    %v1212 = vpop.xlane.xlu0 %1211
    %v1213 = vsub.f32 %v1201, %v1206
    %v1214 = vsub.f32 %v1202, %v1208
    %v1215 = vsub.f32 %v1203, %v1210
    %v1216 = vsub.f32 %v1204, %v1212
    %v1217 = vmul.f32 %v1213, 1.442695
    %v1218 = vpow.pop %v1217
    %v1219 = vmul.f32 %v1214, 1.442695
    %v1220 = vpow.pop %v1219
    %v1221 = vmul.f32 %v1215, 1.442695
    %v1222 = vpow.pop %v1221
    %v1223 = vmul.f32 %v1216, 1.442695
    %v1224 = vpow.pop %v1223
    %1225 = vadd.xlane.f32.xlu0 %v1218
    %v1226 = vpop.xlane.xlu0 %1225
    %1227 = vadd.xlane.f32.xlu0 %v1220
    %v1228 = vpop.xlane.xlu0 %1227
    %1229 = vadd.xlane.f32.xlu0 %v1222
    %v1230 = vpop.xlane.xlu0 %1229
    %1231 = vadd.xlane.f32.xlu0 %v1224
    %v1232 = vpop.xlane.xlu0 %1231
    %v1233 = vrcp.pop %v1226
    %v1234 = vrcp.pop %v1228
    %v1235 = vrcp.pop %v1230
    %v1236 = vrcp.pop %v1232
    %v1237 = vmul.f32 %v1218, %v1233
    %v1238 = vmul.f32 %v1220, %v1234
    %v1239 = vmul.f32 %v1222, %v1235
    %v1240 = vmul.f32 %v1224, %v1236
    %v1241 = vpack.c.bf16 %v1238, %v1237
    %v1242 = vpack.c.bf16 %v1240, %v1239
    %1243 = vmatprep.subr.bf16.mxu0 0
    %1244 = vmatpush1.bf16.msra.mxu0 %v846
    %1245 = vmatprep.subr.bf16.mxu0 0
    %1246 = vmatpush1.bf16.msra.mxu0 %v845
    %1247 = vmatprep.subr.bf16.mxu0 0
    %1248 = vmatpush1.bf16.msra.mxu0 %v844
    %1249 = vmatprep.subr.bf16.mxu0 0
    %1250 = vmatpush1.bf16.msra.mxu0 %v843
    %1251 = vmatprep.subr.bf16.mxu0 0
    %1252 = vmatpush1.bf16.msra.mxu0 %v842
    %1253 = vmatprep.subr.bf16.mxu0 0
    %1254 = vmatpush1.bf16.msra.mxu0 %v841
    %1255 = vmatprep.subr.bf16.mxu0 0
    %1256 = vmatpush1.bf16.msra.mxu0 %v840
    %1257 = vmatprep.subr.bf16.mxu0 0
    %1258 = vmatpush1.bf16.msra.mxu0 %v839
    %1259 = vmatprep.subr.bf16.mxu0 0
    %1260 = vmatpush2.bf16.msra.mxu0 0
    %1261 = vmatprep.subr.bf16.mxu0 0
    %1262 = vmatpush2.bf16.msra.mxu0 0
    %1263 = vmatprep.subr.bf16.mxu0 0
    %1264 = vmatpush2.bf16.msra.mxu0 0
    %1265 = vmatprep.subr.bf16.mxu0 0
    %1266 = vmatpush2.bf16.msra.mxu0 0
    %1267 = vmatprep.subr.bf16.mxu0 0
    %1268 = vmatpush2.bf16.msra.mxu0 0
    %1269 = vmatprep.subr.bf16.mxu0 0
    %1270 = vmatpush2.bf16.msra.mxu0 0
    %1271 = vmatprep.subr.bf16.mxu0 0
    %1272 = vmatpush2.bf16.msra.mxu0 0
    %1273 = vmatprep.subr.bf16.mxu0 0
    %1274 = vmatpush2.bf16.msra.mxu0 0
    %1275 = vmatprep.mubr.bf16.mxu0 0
    %1276 = vmatmul.mubr.bf16.gmra.mxu0 %v1241
    %v1277 = vpop.f32.mrf.mxu0
    %v1278 = vadd.f32 0.0, %v1277
    %v1279 = vpop.f32.mrf.mxu0
    %v1280 = vpop.f32.mrf.mxu0
    %v1281 = vadd.f32 0.0, %v1280
    %v1282 = vpop.f32.mrf.mxu0
    %1283 = vdwg.mxu0
    %1284 = vmatprep.subr.bf16.mxu0 0
    %1285 = vmatpush1.bf16.msra.mxu0 %v854
    %1286 = vmatprep.subr.bf16.mxu0 0
    %1287 = vmatpush1.bf16.msra.mxu0 %v853
    %1288 = vmatprep.subr.bf16.mxu0 0
    %1289 = vmatpush1.bf16.msra.mxu0 %v852
    %1290 = vmatprep.subr.bf16.mxu0 0
    %1291 = vmatpush1.bf16.msra.mxu0 %v851
    %1292 = vmatprep.subr.bf16.mxu0 0
    %1293 = vmatpush1.bf16.msra.mxu0 %v850
    %1294 = vmatprep.subr.bf16.mxu0 0
    %1295 = vmatpush1.bf16.msra.mxu0 %v849
    %1296 = vmatprep.subr.bf16.mxu0 0
    %1297 = vmatpush1.bf16.msra.mxu0 %v848
    %1298 = vmatprep.subr.bf16.mxu0 0
    %1299 = vmatpush1.bf16.msra.mxu0 %v847
    %1300 = vmatprep.subr.bf16.mxu0 0
    %1301 = vmatpush2.bf16.msra.mxu0 0
    %1302 = vmatprep.subr.bf16.mxu0 0
    %1303 = vmatpush2.bf16.msra.mxu0 0
    %1304 = vmatprep.subr.bf16.mxu0 0
    %1305 = vmatpush2.bf16.msra.mxu0 0
    %1306 = vmatprep.subr.bf16.mxu0 0
    %1307 = vmatpush2.bf16.msra.mxu0 0
    %1308 = vmatprep.subr.bf16.mxu0 0
    %1309 = vmatpush2.bf16.msra.mxu0 0
    %1310 = vmatprep.subr.bf16.mxu0 0
    %1311 = vmatpush2.bf16.msra.mxu0 0
    %1312 = vmatprep.subr.bf16.mxu0 0
    %1313 = vmatpush2.bf16.msra.mxu0 0
    %1314 = vmatprep.subr.bf16.mxu0 0
    %1315 = vmatpush2.bf16.msra.mxu0 0
    %1316 = vmatprep.mubr.bf16.mxu0 0
    %1317 = vmatmul.mubr.bf16.gmra.mxu0 %v1242
    %v1318 = vpop.f32.mrf.mxu0
    %v1319 = vadd.f32 0.0, %v1318
    %v1320 = vpop.f32.mrf.mxu0
    %v1321 = vpop.f32.mrf.mxu0
    %v1322 = vadd.f32 0.0, %v1321
    %v1323 = vpop.f32.mrf.mxu0
    %1324 = vdwg.mxu0
    %v1325 = vpack.c.bf16 %v1281, %v1278
    %v1326 = vpack.c.bf16 %v1322, %v1319
    %v1327 = vld [vmem:[%s11] sm:$0xf]
    %v1328 = vld [vmem:[%s11 + $0x4] sm:$0xf]
    %v1329 = vld [vmem:[%s11 + $0x8] sm:$0xf]
    %v1330 = vld [vmem:[%s11 + $0xc] sm:$0xf]
    %v1331 = vld [vmem:[%s11 + $0x10] sm:$0xf]
    %v1332 = vld [vmem:[%s11 + $0x14] sm:$0xf]
    %v1333 = vld [vmem:[%s11 + $0x18] sm:$0xf]
    %v1334 = vld [vmem:[%s11 + $0x1c] sm:$0xf]
    %v1335 = vld [vmem:[%s11 + $0x20] sm:$0xf]
    %v1336 = vld [vmem:[%s11 + $0x24] sm:$0xf]
    %v1337 = vld [vmem:[%s11 + $0x28] sm:$0xf]
    %v1338 = vld [vmem:[%s11 + $0x2c] sm:$0xf]
    %v1339 = vld [vmem:[%s11 + $0x30] sm:$0xf]
    %v1340 = vld [vmem:[%s11 + $0x34] sm:$0xf]
    %v1341 = vld [vmem:[%s11 + $0x38] sm:$0xf]
    %v1342 = vld [vmem:[%s11 + $0x3c] sm:$0xf]
    %v1343 = vld [vmem:[%s11 + $0x40] sm:$0xf]
    %v1344 = vld [vmem:[%s11 + $0x44] sm:$0xf]
    %v1345 = vld [vmem:[%s11 + $0x48] sm:$0xf]
    %v1346 = vld [vmem:[%s11 + $0x4c] sm:$0xf]
    %v1347 = vld [vmem:[%s11 + $0x50] sm:$0xf]
    %v1348 = vld [vmem:[%s11 + $0x54] sm:$0xf]
    %v1349 = vld [vmem:[%s11 + $0x58] sm:$0xf]
    %v1350 = vld [vmem:[%s11 + $0x5c] sm:$0xf]
    %v1351 = vld [vmem:[%s11 + $0x60] sm:$0xf]
    %v1352 = vld [vmem:[%s11 + $0x64] sm:$0xf]
    %v1353 = vld [vmem:[%s11 + $0x68] sm:$0xf]
    %v1354 = vld [vmem:[%s11 + $0x6c] sm:$0xf]
    %v1355 = vld [vmem:[%s11 + $0x70] sm:$0xf]
    %v1356 = vld [vmem:[%s11 + $0x74] sm:$0xf]
    %v1357 = vld [vmem:[%s11 + $0x78] sm:$0xf]
    %v1358 = vld [vmem:[%s11 + $0x7c] sm:$0xf]
    %v1359 = vld [vmem:[#allocation4] sm:$0x1]
    %v1361 = vlaneseq
    %v1362 = vshrl.u32 %v1361, 7
    %v1363 = vsub.s32 0, %v1362
    %v1364 = vrot.slane %v1359, %v1363
    %v1398 = vunpack.c.l.b16 %v1327
    %v1399 = vunpack.c.l.b16 %v1328
    %v1400 = vunpack.c.l.b16 %v1329
    %v1401 = vunpack.c.l.b16 %v1330
    %v1402 = vunpack.c.l.b16 %v1331
    %v1403 = vunpack.c.l.b16 %v1332
    %v1404 = vunpack.c.l.b16 %v1333
    %v1405 = vunpack.c.l.b16 %v1334
    %v1406 = vunpack.c.l.b16 %v1335
    %v1407 = vunpack.c.l.b16 %v1336
    %v1408 = vunpack.c.l.b16 %v1337
    %v1409 = vunpack.c.l.b16 %v1338
    %v1410 = vunpack.c.l.b16 %v1339
    %v1411 = vunpack.c.l.b16 %v1340
    %v1412 = vunpack.c.l.b16 %v1341
    %v1413 = vunpack.c.l.b16 %v1342
    %v1414 = vunpack.c.l.b16 %v1343
    %v1415 = vunpack.c.l.b16 %v1344
    %v1416 = vunpack.c.l.b16 %v1345
    %v1417 = vunpack.c.l.b16 %v1346
    %v1418 = vunpack.c.l.b16 %v1347
    %v1419 = vunpack.c.l.b16 %v1348
    %v1420 = vunpack.c.l.b16 %v1349
    %v1421 = vunpack.c.l.b16 %v1350
    %v1422 = vunpack.c.l.b16 %v1351
    %v1423 = vunpack.c.l.b16 %v1352
    %v1424 = vunpack.c.l.b16 %v1353
    %v1425 = vunpack.c.l.b16 %v1354
    %v1426 = vunpack.c.l.b16 %v1355
    %v1427 = vunpack.c.l.b16 %v1356
    %v1428 = vunpack.c.l.b16 %v1357
    %v1429 = vunpack.c.l.b16 %v1358
    %v1430 = vpack.c.b16 %v1399, %v1398
    %v1431 = vpack.c.b16 %v1401, %v1400
    %v1432 = vpack.c.b16 %v1403, %v1402
    %v1433 = vpack.c.b16 %v1405, %v1404
    %v1434 = vpack.c.b16 %v1407, %v1406
    %v1435 = vpack.c.b16 %v1409, %v1408
    %v1436 = vpack.c.b16 %v1411, %v1410
    %v1437 = vpack.c.b16 %v1413, %v1412
    %v1438 = vpack.c.b16 %v1415, %v1414
    %v1439 = vpack.c.b16 %v1417, %v1416
    %v1440 = vpack.c.b16 %v1419, %v1418
    %v1441 = vpack.c.b16 %v1421, %v1420
    %v1442 = vpack.c.b16 %v1423, %v1422
    %v1443 = vpack.c.b16 %v1425, %v1424
    %v1444 = vpack.c.b16 %v1427, %v1426
    %v1445 = vpack.c.b16 %v1429, %v1428
    %1462 = vmatprep.subr.bf16.mxu0 0
    %1463 = vmatpush1.bf16.msra.mxu0 %v1437
    %1464 = vmatprep.subr.bf16.mxu0 0
    %1465 = vmatpush1.bf16.msra.mxu0 %v1436
    %1466 = vmatprep.subr.bf16.mxu0 0
    %1467 = vmatpush1.bf16.msra.mxu0 %v1435
    %1468 = vmatprep.subr.bf16.mxu0 0
    %1469 = vmatpush1.bf16.msra.mxu0 %v1434
    %1470 = vmatprep.subr.bf16.mxu0 0
    %1471 = vmatpush1.bf16.msra.mxu0 %v1433
    %1472 = vmatprep.subr.bf16.mxu0 0
    %1473 = vmatpush1.bf16.msra.mxu0 %v1432
    %1474 = vmatprep.subr.bf16.mxu0 0
    %1475 = vmatpush1.bf16.msra.mxu0 %v1431
    %1476 = vmatprep.subr.bf16.mxu0 0
    %1477 = vmatpush1.bf16.msra.mxu0 %v1430
    %1478 = vmatprep.subr.bf16.mxu0 0
    %1479 = vmatpush2.bf16.msra.mxu0 %v1445
    %1480 = vmatprep.subr.bf16.mxu0 0
    %1481 = vmatpush2.bf16.msra.mxu0 %v1444
    %1482 = vmatprep.subr.bf16.mxu0 0
    %1483 = vmatpush2.bf16.msra.mxu0 %v1443
    %1484 = vmatprep.subr.bf16.mxu0 0
    %1485 = vmatpush2.bf16.msra.mxu0 %v1442
    %1486 = vmatprep.subr.bf16.mxu0 0
    %1487 = vmatpush2.bf16.msra.mxu0 %v1441
    %1488 = vmatprep.subr.bf16.mxu0 0
    %1489 = vmatpush2.bf16.msra.mxu0 %v1440
    %1490 = vmatprep.subr.bf16.mxu0 0
    %1491 = vmatpush2.bf16.msra.mxu0 %v1439
    %1492 = vmatprep.subr.bf16.mxu0 0
    %1493 = vmatpush2.bf16.msra.mxu0 %v1438
    %1494 = vmatprep.mubr.bf16.mxu0 %v1325
    %1495 = vmatmul.mubr.bf16.gmra.mxu0 %v1101
    %v1496 = vpop.f32.mrf.mxu0
    %v1497 = vadd.f32 %v1364, %v1496
    %v1498 = vpop.f32.mrf.mxu0
    %v1499 = vpop.f32.mrf.mxu0
    %v1500 = vadd.f32 %v1364, %v1499
    %v1501 = vpop.f32.mrf.mxu0
    %1502 = vmatprep.mubr.bf16.mxu0 %v1326
    %1503 = vmatmul.mubr.bf16.gmra.mxu0 %v1102
    %v1504 = vpop.f32.mrf.mxu0
    %v1505 = vadd.f32 %v1364, %v1504
    %v1506 = vpop.f32.mrf.mxu0
    %v1507 = vpop.f32.mrf.mxu0
    %v1508 = vadd.f32 %v1364, %v1507
    %v1509 = vpop.f32.mrf.mxu0
    %1510 = vdwg.mxu0
    %v1511 = vtanh.pop %v1497
    %v1512 = vtanh.pop %v1500
    %v1513 = vtanh.pop %v1505
    %v1514 = vtanh.pop %v1508
    %v1515 = vpack.c.bf16 %v1512, %v1511
    %v1516 = vpack.c.bf16 %v1514, %v1513
    %v1519 = vunpack.c.l.b16 %v1515
    %v1520 = vunpack.c.h.b16 %v1515
    %v1521 = vunpack.c.l.b16 %v1516
    %v1522 = vunpack.c.h.b16 %v1516
    %v1523 = vpack.c.b16 %v1519, %v1519
    %v1524 = vpack.c.b16 %v1520, %v1520
    %v1525 = vpack.c.b16 %v1521, %v1521
    %v1526 = vpack.c.b16 %v1522, %v1522
    %1531 = vst [vmem:[%s15] sm:$0xf] %v1523
    %1532 = vst [vmem:[%s15 + $0x4] sm:$0xf] %v1524
    %1533 = vst [vmem:[%s15 + $0x8] sm:$0xf] %v1525
    %1534 = vst [vmem:[%s15 + $0xc] sm:$0xf] %v1526
    %1535 = vst [vmem:[%s16] sm:$0xff] %v1237
    %1536 = vst [vmem:[%s16 + $0x8] sm:$0xff] %v1238
    %1537 = vst [vmem:[%s16 + $0x10] sm:$0xff] %v1239
    %1538 = vst [vmem:[%s16 + $0x18] sm:$0xff] %v1240
    %v1539 = vld [vmem:[%s1] sm:$0xff]
    %v1540 = vld [vmem:[%s1 + $0x8] sm:$0xff]
    %v1541 = vld [vmem:[%s1 + $0x10] sm:$0xff]
    %v1542 = vld [vmem:[%s1 + $0x18] sm:$0xff]
    %v1543 = vld [vmem:[%s1 + $0x20] sm:$0xff]
    %v1544 = vld [vmem:[%s1 + $0x28] sm:$0xff]
    %v1545 = vld [vmem:[%s1 + $0x30] sm:$0xff]
    %v1546 = vld [vmem:[%s1 + $0x38] sm:$0xff]
    %1547 = vset.pattern.permute.xlu0 0
    %1548 = vperm.xlu0 %1547, %v1539
    %v1549 = vpop.permute.xlu0 %1548
    %1550 = vset.pattern.permute.xlu0 0
    %1551 = vperm.xlu0 %1550, %v1540
    %v1552 = vpop.permute.xlu0 %1551
    %1553 = vset.pattern.permute.xlu0 0
    %1554 = vperm.xlu0 %1553, %v1541
    %v1555 = vpop.permute.xlu0 %1554
    %1556 = vset.pattern.permute.xlu0 0
    %1557 = vperm.xlu0 %1556, %v1542
    %v1558 = vpop.permute.xlu0 %1557
    %1559 = vset.pattern.permute.xlu0 0
    %1560 = vperm.xlu0 %1559, %v1543
    %v1561 = vpop.permute.xlu0 %1560
    %1562 = vset.pattern.permute.xlu0 0
    %1563 = vperm.xlu0 %1562, %v1544
    %v1564 = vpop.permute.xlu0 %1563
    %1565 = vset.pattern.permute.xlu0 0
    %1566 = vperm.xlu0 %1565, %v1545
    %v1567 = vpop.permute.xlu0 %1566
    %1568 = vset.pattern.permute.xlu0 0
    %1569 = vperm.xlu0 %1568, %v1546
    %v1570 = vpop.permute.xlu0 %1569
    %vm1571 = vcmp.eq.s32.totalorder %v108, %v1549
    %vm1572 = vcmp.eq.s32.totalorder %v108, %v1552
    %vm1573 = vcmp.eq.s32.totalorder %v108, %v1555
    %vm1574 = vcmp.eq.s32.totalorder %v108, %v1558
    %vm1575 = vcmp.eq.s32.totalorder %v108, %v1561
    %vm1576 = vcmp.eq.s32.totalorder %v108, %v1564
    %vm1577 = vcmp.eq.s32.totalorder %v108, %v1567
    %vm1578 = vcmp.eq.s32.totalorder %v108, %v1570
    %v1579 = vsel %vm1571, 1, 0
    %v1580 = vsel %vm1572, 1, 0
    %v1581 = vsel %vm1573, 1, 0
    %v1582 = vsel %vm1574, 1, 0
    %v1583 = vsel %vm1575, 1, 0
    %v1584 = vsel %vm1576, 1, 0
    %v1585 = vsel %vm1577, 1, 0
    %v1586 = vsel %vm1578, 1, 0
    %v1587 = vcvt.s32.f32 %v1579
    %v1588 = vcvt.s32.f32 %v1580
    %v1589 = vcvt.s32.f32 %v1581
    %v1590 = vcvt.s32.f32 %v1582
    %v1591 = vcvt.s32.f32 %v1583
    %v1592 = vcvt.s32.f32 %v1584
    %v1593 = vcvt.s32.f32 %v1585
    %v1594 = vcvt.s32.f32 %v1586
    %v1595 = vpack.c.bf16 %v1588, %v1587
    %v1596 = vpack.c.bf16 %v1590, %v1589
    %v1597 = vpack.c.bf16 %v1592, %v1591
    %v1598 = vpack.c.bf16 %v1594, %v1593
    %v1599 = vld [vmem:[#allocation2] sm:$0xf]
    %v1600 = vld [vmem:[#allocation2 + $0x4] sm:$0xf]
    %v1601 = vld [vmem:[#allocation2 + $0x8] sm:$0xf]
    %v1602 = vld [vmem:[#allocation2 + $0xc] sm:$0xf]
    %v1603 = vld [vmem:[#allocation2 + $0x10] sm:$0xf]
    %v1604 = vld [vmem:[#allocation2 + $0x14] sm:$0xf]
    %v1611 = vunpack.c.l.b16 %v1599
    %v1612 = vunpack.c.l.b16 %v1600
    %v1613 = vunpack.c.l.b16 %v1601
    %v1614 = vunpack.c.l.b16 %v1602
    %v1615 = vunpack.c.l.b16 %v1603
    %v1616 = vunpack.c.l.b16 %v1604
    %v1617 = vpack.c.b16 %v1612, %v1611
    %v1618 = vpack.c.b16 %v1614, %v1613
    %v1619 = vpack.c.b16 %v1616, %v1615
    %vm1623 = vcmask 392192
    %v1625 = vsel %vm1623, %v1595, 0
    %v1628 = vsel %vm1623, %v1596, 0
    %v1631 = vsel %vm1623, %v1597, 0
    %v1634 = vsel %vm1623, %v1598, 0
    %1636 = vmatprep.subr.bf16.mxu0 0
    %1637 = vmatpush1.bf16.msra.mxu0 0
    %1638 = vmatprep.subr.bf16.mxu0 0
    %1639 = vmatpush1.bf16.msra.mxu0 0
    %1640 = vmatprep.subr.bf16.mxu0 0
    %1641 = vmatpush1.bf16.msra.mxu0 0
    %1642 = vmatprep.subr.bf16.mxu0 0
    %1643 = vmatpush1.bf16.msra.mxu0 0
    %1644 = vmatprep.subr.bf16.mxu0 0
    %1645 = vmatpush1.bf16.msra.mxu0 0
    %1646 = vmatprep.subr.bf16.mxu0 0
    %1647 = vmatpush1.bf16.msra.mxu0 %v1619
    %1648 = vmatprep.subr.bf16.mxu0 0
    %1649 = vmatpush1.bf16.msra.mxu0 %v1618
    %1650 = vmatprep.subr.bf16.mxu0 0
    %1651 = vmatpush1.bf16.msra.mxu0 %v1617
    %1652 = vmatprep.subr.bf16.mxu0 0
    %1653 = vmatpush2.bf16.msra.mxu0 0
    %1654 = vmatprep.subr.bf16.mxu0 0
    %1655 = vmatpush2.bf16.msra.mxu0 0
    %1656 = vmatprep.subr.bf16.mxu0 0
    %1657 = vmatpush2.bf16.msra.mxu0 0
    %1658 = vmatprep.subr.bf16.mxu0 0
    %1659 = vmatpush2.bf16.msra.mxu0 0
    %1660 = vmatprep.subr.bf16.mxu0 0
    %1661 = vmatpush2.bf16.msra.mxu0 0
    %1662 = vmatprep.subr.bf16.mxu0 0
    %1663 = vmatpush2.bf16.msra.mxu0 0
    %1664 = vmatprep.subr.bf16.mxu0 0
    %1665 = vmatpush2.bf16.msra.mxu0 0
    %1666 = vmatprep.subr.bf16.mxu0 0
    %1667 = vmatpush2.bf16.msra.mxu0 0
    %1668 = vmatprep.mubr.bf16.mxu0 0
    %1669 = vmatmul.mubr.bf16.gmra.mxu0 %v1625
    %v1670 = vpop.f32.mrf.mxu0
    %v1671 = vadd.f32 0.0, %v1670
    %v1672 = vpop.f32.mrf.mxu0
    %v1673 = vpop.f32.mrf.mxu0
    %v1674 = vadd.f32 0.0, %v1673
    %v1675 = vpop.f32.mrf.mxu0
    %1676 = vmatprep.mubr.bf16.mxu0 0
    %1677 = vmatmul.mubr.bf16.gmra.mxu0 %v1628
    %v1678 = vpop.f32.mrf.mxu0
    %v1679 = vadd.f32 0.0, %v1678
    %v1680 = vpop.f32.mrf.mxu0
    %v1681 = vpop.f32.mrf.mxu0
    %v1682 = vadd.f32 0.0, %v1681
    %v1683 = vpop.f32.mrf.mxu0
    %1684 = vmatprep.mubr.bf16.mxu0 0
    %1685 = vmatmul.mubr.bf16.gmra.mxu0 %v1631
    %v1686 = vpop.f32.mrf.mxu0
    %v1687 = vadd.f32 0.0, %v1686
    %v1688 = vpop.f32.mrf.mxu0
    %v1689 = vpop.f32.mrf.mxu0
    %v1690 = vadd.f32 0.0, %v1689
    %v1691 = vpop.f32.mrf.mxu0
    %1692 = vmatprep.mubr.bf16.mxu0 0
    %1693 = vmatmul.mubr.bf16.gmra.mxu0 %v1634
    %v1694 = vpop.f32.mrf.mxu0
    %v1695 = vadd.f32 0.0, %v1694
    %v1696 = vpop.f32.mrf.mxu0
    %v1697 = vpop.f32.mrf.mxu0
    %v1698 = vadd.f32 0.0, %v1697
    %v1699 = vpop.f32.mrf.mxu0
    %1700 = vdwg.mxu0
    %v1701 = vadd.f32 %v1671, %v1092
    %v1702 = vadd.f32 %v1674, %v1092
    %v1703 = vadd.f32 %v1679, %v1092
    %v1704 = vadd.f32 %v1682, %v1092
    %v1705 = vadd.f32 %v1687, %v1096
    %v1706 = vadd.f32 %v1690, %v1096
    %v1707 = vadd.f32 %v1695, %v1096
    %v1708 = vadd.f32 %v1698, %v1096
    %v1709 = vpack.c.bf16 %v1702, %v1701
    %v1710 = vpack.c.bf16 %v1704, %v1703
    %v1711 = vpack.c.bf16 %v1706, %v1705
    %v1712 = vpack.c.bf16 %v1708, %v1707
    %1713 = vmatprep.subr.bf16.mxu0 0
    %1714 = vmatpush1.bf16.xpose.msra.mxu0 %v846
    %1715 = vmatprep.subr.bf16.mxu0 0
    %1716 = vmatpush1.bf16.xpose.msra.mxu0 %v845
    %1717 = vmatprep.subr.bf16.mxu0 0
    %1718 = vmatpush1.bf16.xpose.msra.mxu0 %v844
    %1719 = vmatprep.subr.bf16.mxu0 0
    %1720 = vmatpush1.bf16.xpose.msra.mxu0 %v843
    %1721 = vmatprep.subr.bf16.mxu0 0
    %1722 = vmatpush1.bf16.xpose.msra.mxu0 %v842
    %1723 = vmatprep.subr.bf16.mxu0 0
    %1724 = vmatpush1.bf16.xpose.msra.mxu0 %v841
    %1725 = vmatprep.subr.bf16.mxu0 0
    %1726 = vmatpush1.bf16.xpose.msra.mxu0 %v840
    %1727 = vmatprep.subr.bf16.mxu0 0
    %1728 = vmatpush1.bf16.xpose.msra.mxu0 %v839
    %1729 = vmatprep.subr.bf16.mxu0 0
    %1730 = vmatpush2.bf16.xpose.msra.mxu0 0
    %1731 = vmatprep.subr.bf16.mxu0 0
    %1732 = vmatpush2.bf16.xpose.msra.mxu0 0
    %1733 = vmatprep.subr.bf16.mxu0 0
    %1734 = vmatpush2.bf16.xpose.msra.mxu0 0
    %1735 = vmatprep.subr.bf16.mxu0 0
    %1736 = vmatpush2.bf16.xpose.msra.mxu0 0
    %1737 = vmatprep.subr.bf16.mxu0 0
    %1738 = vmatpush2.bf16.xpose.msra.mxu0 0
    %1739 = vmatprep.subr.bf16.mxu0 0
    %1740 = vmatpush2.bf16.xpose.msra.mxu0 0
    %1741 = vmatprep.subr.bf16.mxu0 0
    %1742 = vmatpush2.bf16.xpose.msra.mxu0 0
    %1743 = vmatprep.subr.bf16.mxu0 0
    %1744 = vmatpush2.bf16.xpose.msra.mxu0 0
    %1745 = vmatprep.mubr.bf16.mxu0 0
    %1746 = vmatmul.mubr.bf16.gmra.mxu0 %v1709
    %v1747 = vpop.f32.mrf.mxu0
    %v1748 = vadd.f32 0.0, %v1747
    %v1749 = vpop.f32.mrf.mxu0
    %v1750 = vpop.f32.mrf.mxu0
    %v1751 = vadd.f32 0.0, %v1750
    %v1752 = vpop.f32.mrf.mxu0
    %1753 = vmatprep.mubr.bf16.mxu0 0
    %1754 = vmatmul.mubr.bf16.gmra.mxu0 %v1710
    %v1755 = vpop.f32.mrf.mxu0
    %v1756 = vadd.f32 0.0, %v1755
    %v1757 = vpop.f32.mrf.mxu0
    %v1758 = vpop.f32.mrf.mxu0
    %v1759 = vadd.f32 0.0, %v1758
    %v1760 = vpop.f32.mrf.mxu0
    %1761 = vdwg.mxu0
    %1762 = vmatprep.subr.bf16.mxu0 0
    %1763 = vmatpush1.bf16.xpose.msra.mxu0 %v854
    %1764 = vmatprep.subr.bf16.mxu0 0
    %1765 = vmatpush1.bf16.xpose.msra.mxu0 %v853
    %1766 = vmatprep.subr.bf16.mxu0 0
    %1767 = vmatpush1.bf16.xpose.msra.mxu0 %v852
    %1768 = vmatprep.subr.bf16.mxu0 0
    %1769 = vmatpush1.bf16.xpose.msra.mxu0 %v851
    %1770 = vmatprep.subr.bf16.mxu0 0
    %1771 = vmatpush1.bf16.xpose.msra.mxu0 %v850
    %1772 = vmatprep.subr.bf16.mxu0 0
    %1773 = vmatpush1.bf16.xpose.msra.mxu0 %v849
    %1774 = vmatprep.subr.bf16.mxu0 0
    %1775 = vmatpush1.bf16.xpose.msra.mxu0 %v848
    %1776 = vmatprep.subr.bf16.mxu0 0
    %1777 = vmatpush1.bf16.xpose.msra.mxu0 %v847
    %1778 = vmatprep.subr.bf16.mxu0 0
    %1779 = vmatpush2.bf16.xpose.msra.mxu0 0
    %1780 = vmatprep.subr.bf16.mxu0 0
    %1781 = vmatpush2.bf16.xpose.msra.mxu0 0
    %1782 = vmatprep.subr.bf16.mxu0 0
    %1783 = vmatpush2.bf16.xpose.msra.mxu0 0
    %1784 = vmatprep.subr.bf16.mxu0 0
    %1785 = vmatpush2.bf16.xpose.msra.mxu0 0
    %1786 = vmatprep.subr.bf16.mxu0 0
    %1787 = vmatpush2.bf16.xpose.msra.mxu0 0
    %1788 = vmatprep.subr.bf16.mxu0 0
    %1789 = vmatpush2.bf16.xpose.msra.mxu0 0
    %1790 = vmatprep.subr.bf16.mxu0 0
    %1791 = vmatpush2.bf16.xpose.msra.mxu0 0
    %1792 = vmatprep.subr.bf16.mxu0 0
    %1793 = vmatpush2.bf16.xpose.msra.mxu0 0
    %1794 = vmatprep.mubr.bf16.mxu0 0
    %1795 = vmatmul.mubr.bf16.gmra.mxu0 %v1711
    %v1796 = vpop.f32.mrf.mxu0
    %v1797 = vadd.f32 0.0, %v1796
    %v1798 = vpop.f32.mrf.mxu0
    %v1799 = vpop.f32.mrf.mxu0
    %v1800 = vadd.f32 0.0, %v1799
    %v1801 = vpop.f32.mrf.mxu0
    %1802 = vmatprep.mubr.bf16.mxu0 0
    %1803 = vmatmul.mubr.bf16.gmra.mxu0 %v1712
    %v1804 = vpop.f32.mrf.mxu0
    %v1805 = vadd.f32 0.0, %v1804
    %v1806 = vpop.f32.mrf.mxu0
    %v1807 = vpop.f32.mrf.mxu0
    %v1808 = vadd.f32 0.0, %v1807
    %v1809 = vpop.f32.mrf.mxu0
    %1810 = vdwg.mxu0
    %v1811 = vsel %vm1199, %v1748, -1e+09
    %v1812 = vsel %vm1199, %v1751, -1e+09
    %v1813 = vsel %vm1199, %v1756, -1e+09
    %v1814 = vsel %vm1199, %v1759, -1e+09
    %v1815 = vsel %vm1200, %v1797, -1e+09
    %v1816 = vsel %vm1200, %v1800, -1e+09
    %v1817 = vsel %vm1200, %v1805, -1e+09
    %v1818 = vsel %vm1200, %v1808, -1e+09
    %1819 = vmax.xlane.f32.xlu0 %v1811
    %v1820 = vpop.xlane.xlu0 %1819
    %1821 = vmax.xlane.f32.xlu0 %v1812
    %v1822 = vpop.xlane.xlu0 %1821
    %1823 = vmax.xlane.f32.xlu0 %v1813
    %v1824 = vpop.xlane.xlu0 %1823
    %1825 = vmax.xlane.f32.xlu0 %v1814
    %v1826 = vpop.xlane.xlu0 %1825
    %1827 = vmax.xlane.f32.xlu0 %v1815
    %v1828 = vpop.xlane.xlu0 %1827
    %1829 = vmax.xlane.f32.xlu0 %v1816
    %v1830 = vpop.xlane.xlu0 %1829
    %1831 = vmax.xlane.f32.xlu0 %v1817
    %v1832 = vpop.xlane.xlu0 %1831
    %1833 = vmax.xlane.f32.xlu0 %v1818
    %v1834 = vpop.xlane.xlu0 %1833
    %v1835 = vsub.f32 %v1811, %v1820
    %v1836 = vsub.f32 %v1812, %v1822
    %v1837 = vsub.f32 %v1813, %v1824
    %v1838 = vsub.f32 %v1814, %v1826
    %v1839 = vsub.f32 %v1815, %v1828
    %v1840 = vsub.f32 %v1816, %v1830
    %v1841 = vsub.f32 %v1817, %v1832
    %v1842 = vsub.f32 %v1818, %v1834
    %v1843 = vmul.f32 %v1835, 1.442695
    %v1844 = vpow.pop %v1843
    %v1845 = vmul.f32 %v1836, 1.442695
    %v1846 = vpow.pop %v1845
    %v1847 = vmul.f32 %v1837, 1.442695
    %v1848 = vpow.pop %v1847
    %v1849 = vmul.f32 %v1838, 1.442695
    %v1850 = vpow.pop %v1849
    %v1851 = vmul.f32 %v1839, 1.442695
    %v1852 = vpow.pop %v1851
    %v1853 = vmul.f32 %v1840, 1.442695
    %v1854 = vpow.pop %v1853
    %v1855 = vmul.f32 %v1841, 1.442695
    %v1856 = vpow.pop %v1855
    %v1857 = vmul.f32 %v1842, 1.442695
    %v1858 = vpow.pop %v1857
    %1859 = vadd.xlane.f32.xlu0 %v1844
    %v1860 = vpop.xlane.xlu0 %1859
    %1861 = vadd.xlane.f32.xlu0 %v1846
    %v1862 = vpop.xlane.xlu0 %1861
    %1863 = vadd.xlane.f32.xlu0 %v1848
    %v1864 = vpop.xlane.xlu0 %1863
    %1865 = vadd.xlane.f32.xlu0 %v1850
    %v1866 = vpop.xlane.xlu0 %1865
    %1867 = vadd.xlane.f32.xlu0 %v1852
    %v1868 = vpop.xlane.xlu0 %1867
    %1869 = vadd.xlane.f32.xlu0 %v1854
    %v1870 = vpop.xlane.xlu0 %1869
    %1871 = vadd.xlane.f32.xlu0 %v1856
    %v1872 = vpop.xlane.xlu0 %1871
    %1873 = vadd.xlane.f32.xlu0 %v1858
    %v1874 = vpop.xlane.xlu0 %1873
    %v1875 = vrcp.pop %v1860
    %v1876 = vrcp.pop %v1862
    %v1877 = vrcp.pop %v1864
    %v1878 = vrcp.pop %v1866
    %v1879 = vrcp.pop %v1868
    %v1880 = vrcp.pop %v1870
    %v1881 = vrcp.pop %v1872
    %v1882 = vrcp.pop %v1874
    %v1883 = vmul.f32 %v1844, %v1875
    %v1884 = vmul.f32 %v1846, %v1876
    %v1885 = vmul.f32 %v1848, %v1877
    %v1886 = vmul.f32 %v1850, %v1878
    %v1887 = vmul.f32 %v1852, %v1879
    %v1888 = vmul.f32 %v1854, %v1880
    %v1889 = vmul.f32 %v1856, %v1881
    %v1890 = vmul.f32 %v1858, %v1882
    %v1891 = vpack.c.bf16 %v1884, %v1883
    %v1892 = vpack.c.bf16 %v1886, %v1885
    %v1893 = vpack.c.bf16 %v1888, %v1887
    %v1894 = vpack.c.bf16 %v1890, %v1889
    %1895 = vmatprep.subr.bf16.mxu0 0
    %1896 = vmatpush1.bf16.msra.mxu0 %v846
    %1897 = vmatprep.subr.bf16.mxu0 0
    %1898 = vmatpush1.bf16.msra.mxu0 %v845
    %1899 = vmatprep.subr.bf16.mxu0 0
    %1900 = vmatpush1.bf16.msra.mxu0 %v844
    %1901 = vmatprep.subr.bf16.mxu0 0
    %1902 = vmatpush1.bf16.msra.mxu0 %v843
    %1903 = vmatprep.subr.bf16.mxu0 0
    %1904 = vmatpush1.bf16.msra.mxu0 %v842
    %1905 = vmatprep.subr.bf16.mxu0 0
    %1906 = vmatpush1.bf16.msra.mxu0 %v841
    %1907 = vmatprep.subr.bf16.mxu0 0
    %1908 = vmatpush1.bf16.msra.mxu0 %v840
    %1909 = vmatprep.subr.bf16.mxu0 0
    %1910 = vmatpush1.bf16.msra.mxu0 %v839
    %1911 = vmatprep.subr.bf16.mxu0 0
    %1912 = vmatpush2.bf16.msra.mxu0 0
    %1913 = vmatprep.subr.bf16.mxu0 0
    %1914 = vmatpush2.bf16.msra.mxu0 0
    %1915 = vmatprep.subr.bf16.mxu0 0
    %1916 = vmatpush2.bf16.msra.mxu0 0
    %1917 = vmatprep.subr.bf16.mxu0 0
    %1918 = vmatpush2.bf16.msra.mxu0 0
    %1919 = vmatprep.subr.bf16.mxu0 0
    %1920 = vmatpush2.bf16.msra.mxu0 0
    %1921 = vmatprep.subr.bf16.mxu0 0
    %1922 = vmatpush2.bf16.msra.mxu0 0
    %1923 = vmatprep.subr.bf16.mxu0 0
    %1924 = vmatpush2.bf16.msra.mxu0 0
    %1925 = vmatprep.subr.bf16.mxu0 0
    %1926 = vmatpush2.bf16.msra.mxu0 0
    %1927 = vmatprep.mubr.bf16.mxu0 0
    %1928 = vmatmul.mubr.bf16.gmra.mxu0 %v1891
    %v1929 = vpop.f32.mrf.mxu0
    %v1930 = vadd.f32 0.0, %v1929
    %v1931 = vpop.f32.mrf.mxu0
    %v1932 = vpop.f32.mrf.mxu0
    %v1933 = vadd.f32 0.0, %v1932
    %v1934 = vpop.f32.mrf.mxu0
    %1935 = vmatprep.mubr.bf16.mxu0 0
    %1936 = vmatmul.mubr.bf16.gmra.mxu0 %v1892
    %v1937 = vpop.f32.mrf.mxu0
    %v1938 = vadd.f32 0.0, %v1937
    %v1939 = vpop.f32.mrf.mxu0
    %v1940 = vpop.f32.mrf.mxu0
    %v1941 = vadd.f32 0.0, %v1940
    %v1942 = vpop.f32.mrf.mxu0
    %1943 = vdwg.mxu0
    %1944 = vmatprep.subr.bf16.mxu0 0
    %1945 = vmatpush1.bf16.msra.mxu0 %v854
    %1946 = vmatprep.subr.bf16.mxu0 0
    %1947 = vmatpush1.bf16.msra.mxu0 %v853
    %1948 = vmatprep.subr.bf16.mxu0 0
    %1949 = vmatpush1.bf16.msra.mxu0 %v852
    %1950 = vmatprep.subr.bf16.mxu0 0
    %1951 = vmatpush1.bf16.msra.mxu0 %v851
    %1952 = vmatprep.subr.bf16.mxu0 0
    %1953 = vmatpush1.bf16.msra.mxu0 %v850
    %1954 = vmatprep.subr.bf16.mxu0 0
    %1955 = vmatpush1.bf16.msra.mxu0 %v849
    %1956 = vmatprep.subr.bf16.mxu0 0
    %1957 = vmatpush1.bf16.msra.mxu0 %v848
    %1958 = vmatprep.subr.bf16.mxu0 0
    %1959 = vmatpush1.bf16.msra.mxu0 %v847
    %1960 = vmatprep.subr.bf16.mxu0 0
    %1961 = vmatpush2.bf16.msra.mxu0 0
    %1962 = vmatprep.subr.bf16.mxu0 0
    %1963 = vmatpush2.bf16.msra.mxu0 0
    %1964 = vmatprep.subr.bf16.mxu0 0
    %1965 = vmatpush2.bf16.msra.mxu0 0
    %1966 = vmatprep.subr.bf16.mxu0 0
    %1967 = vmatpush2.bf16.msra.mxu0 0
    %1968 = vmatprep.subr.bf16.mxu0 0
    %1969 = vmatpush2.bf16.msra.mxu0 0
    %1970 = vmatprep.subr.bf16.mxu0 0
    %1971 = vmatpush2.bf16.msra.mxu0 0
    %1972 = vmatprep.subr.bf16.mxu0 0
    %1973 = vmatpush2.bf16.msra.mxu0 0
    %1974 = vmatprep.subr.bf16.mxu0 0
    %1975 = vmatpush2.bf16.msra.mxu0 0
    %1976 = vmatprep.mubr.bf16.mxu0 0
    %1977 = vmatmul.mubr.bf16.gmra.mxu0 %v1893
    %v1978 = vpop.f32.mrf.mxu0
    %v1979 = vadd.f32 0.0, %v1978
    %v1980 = vpop.f32.mrf.mxu0
    %v1981 = vpop.f32.mrf.mxu0
    %v1982 = vadd.f32 0.0, %v1981
    %v1983 = vpop.f32.mrf.mxu0
    %1984 = vmatprep.mubr.bf16.mxu0 0
    %1985 = vmatmul.mubr.bf16.gmra.mxu0 %v1894
    %v1986 = vpop.f32.mrf.mxu0
    %v1987 = vadd.f32 0.0, %v1986
    %v1988 = vpop.f32.mrf.mxu0
    %v1989 = vpop.f32.mrf.mxu0
    %v1990 = vadd.f32 0.0, %v1989
    %v1991 = vpop.f32.mrf.mxu0
    %1992 = vdwg.mxu0
    %v1993 = vpack.c.bf16 %v1933, %v1930
    %v1994 = vpack.c.bf16 %v1941, %v1938
    %v1995 = vpack.c.bf16 %v1982, %v1979
    %v1996 = vpack.c.bf16 %v1990, %v1987
    %v1997 = vld [vmem:[%s9] sm:$0xf]
    %v1998 = vld [vmem:[%s9 + $0x4] sm:$0xf]
    %v1999 = vld [vmem:[%s9 + $0x8] sm:$0xf]
    %v2000 = vld [vmem:[%s9 + $0xc] sm:$0xf]
    %v2001 = vld [vmem:[%s9 + $0x10] sm:$0xf]
    %v2002 = vld [vmem:[%s9 + $0x14] sm:$0xf]
    %v2003 = vld [vmem:[%s9 + $0x18] sm:$0xf]
    %v2004 = vld [vmem:[%s9 + $0x1c] sm:$0xf]
    %v2005 = vld [vmem:[%s9 + $0x20] sm:$0xf]
    %v2006 = vld [vmem:[%s9 + $0x24] sm:$0xf]
    %v2007 = vld [vmem:[%s9 + $0x28] sm:$0xf]
    %v2008 = vld [vmem:[%s9 + $0x2c] sm:$0xf]
    %v2009 = vld [vmem:[%s9 + $0x30] sm:$0xf]
    %v2010 = vld [vmem:[%s9 + $0x34] sm:$0xf]
    %v2011 = vld [vmem:[%s9 + $0x38] sm:$0xf]
    %v2012 = vld [vmem:[%s9 + $0x3c] sm:$0xf]
    %v2013 = vld [vmem:[%s9 + $0x40] sm:$0xf]
    %v2014 = vld [vmem:[%s9 + $0x44] sm:$0xf]
    %v2015 = vld [vmem:[%s9 + $0x48] sm:$0xf]
    %v2016 = vld [vmem:[%s9 + $0x4c] sm:$0xf]
    %v2017 = vld [vmem:[%s9 + $0x50] sm:$0xf]
    %v2018 = vld [vmem:[%s9 + $0x54] sm:$0xf]
    %v2019 = vld [vmem:[%s9 + $0x58] sm:$0xf]
    %v2020 = vld [vmem:[%s9 + $0x5c] sm:$0xf]
    %v2021 = vld [vmem:[%s9 + $0x60] sm:$0xf]
    %v2022 = vld [vmem:[%s9 + $0x64] sm:$0xf]
    %v2023 = vld [vmem:[%s9 + $0x68] sm:$0xf]
    %v2024 = vld [vmem:[%s9 + $0x6c] sm:$0xf]
    %v2025 = vld [vmem:[%s9 + $0x70] sm:$0xf]
    %v2026 = vld [vmem:[%s9 + $0x74] sm:$0xf]
    %v2027 = vld [vmem:[%s9 + $0x78] sm:$0xf]
    %v2028 = vld [vmem:[%s9 + $0x7c] sm:$0xf]
    %v2029 = vld [vmem:[%s10] sm:$0x1]
    %v2031 = vlaneseq
    %v2032 = vshrl.u32 %v2031, 7
    %v2033 = vsub.s32 0, %v2032
    %v2034 = vrot.slane %v2029, %v2033
    %v2068 = vunpack.c.l.b16 %v1997
    %v2069 = vunpack.c.l.b16 %v1998
    %v2070 = vunpack.c.l.b16 %v1999
    %v2071 = vunpack.c.l.b16 %v2000
    %v2072 = vunpack.c.l.b16 %v2001
    %v2073 = vunpack.c.l.b16 %v2002
    %v2074 = vunpack.c.l.b16 %v2003
    %v2075 = vunpack.c.l.b16 %v2004
    %v2076 = vunpack.c.l.b16 %v2005
    %v2077 = vunpack.c.l.b16 %v2006
    %v2078 = vunpack.c.l.b16 %v2007
    %v2079 = vunpack.c.l.b16 %v2008
    %v2080 = vunpack.c.l.b16 %v2009
    %v2081 = vunpack.c.l.b16 %v2010
    %v2082 = vunpack.c.l.b16 %v2011
    %v2083 = vunpack.c.l.b16 %v2012
    %v2084 = vunpack.c.l.b16 %v2013
    %v2085 = vunpack.c.l.b16 %v2014
    %v2086 = vunpack.c.l.b16 %v2015
    %v2087 = vunpack.c.l.b16 %v2016
    %v2088 = vunpack.c.l.b16 %v2017
    %v2089 = vunpack.c.l.b16 %v2018
    %v2090 = vunpack.c.l.b16 %v2019
    %v2091 = vunpack.c.l.b16 %v2020
    %v2092 = vunpack.c.l.b16 %v2021
    %v2093 = vunpack.c.l.b16 %v2022
    %v2094 = vunpack.c.l.b16 %v2023
    %v2095 = vunpack.c.l.b16 %v2024
    %v2096 = vunpack.c.l.b16 %v2025
    %v2097 = vunpack.c.l.b16 %v2026
    %v2098 = vunpack.c.l.b16 %v2027
    %v2099 = vunpack.c.l.b16 %v2028
    %v2100 = vpack.c.b16 %v2069, %v2068
    %v2101 = vpack.c.b16 %v2071, %v2070
    %v2102 = vpack.c.b16 %v2073, %v2072
    %v2103 = vpack.c.b16 %v2075, %v2074
    %v2104 = vpack.c.b16 %v2077, %v2076
    %v2105 = vpack.c.b16 %v2079, %v2078
    %v2106 = vpack.c.b16 %v2081, %v2080
    %v2107 = vpack.c.b16 %v2083, %v2082
    %v2108 = vpack.c.b16 %v2085, %v2084
    %v2109 = vpack.c.b16 %v2087, %v2086
    %v2110 = vpack.c.b16 %v2089, %v2088
    %v2111 = vpack.c.b16 %v2091, %v2090
    %v2112 = vpack.c.b16 %v2093, %v2092
    %v2113 = vpack.c.b16 %v2095, %v2094
    %v2114 = vpack.c.b16 %v2097, %v2096
    %v2115 = vpack.c.b16 %v2099, %v2098
    %2132 = vmatprep.subr.bf16.mxu0 0
    %2133 = vmatpush1.bf16.msra.mxu0 %v2107
    %2134 = vmatprep.subr.bf16.mxu0 0
    %2135 = vmatpush1.bf16.msra.mxu0 %v2106
    %2136 = vmatprep.subr.bf16.mxu0 0
    %2137 = vmatpush1.bf16.msra.mxu0 %v2105
    %2138 = vmatprep.subr.bf16.mxu0 0
    %2139 = vmatpush1.bf16.msra.mxu0 %v2104
    %2140 = vmatprep.subr.bf16.mxu0 0
    %2141 = vmatpush1.bf16.msra.mxu0 %v2103
    %2142 = vmatprep.subr.bf16.mxu0 0
    %2143 = vmatpush1.bf16.msra.mxu0 %v2102
    %2144 = vmatprep.subr.bf16.mxu0 0
    %2145 = vmatpush1.bf16.msra.mxu0 %v2101
    %2146 = vmatprep.subr.bf16.mxu0 0
    %2147 = vmatpush1.bf16.msra.mxu0 %v2100
    %2148 = vmatprep.subr.bf16.mxu0 0
    %2149 = vmatpush2.bf16.msra.mxu0 %v2115
    %2150 = vmatprep.subr.bf16.mxu0 0
    %2151 = vmatpush2.bf16.msra.mxu0 %v2114
    %2152 = vmatprep.subr.bf16.mxu0 0
    %2153 = vmatpush2.bf16.msra.mxu0 %v2113
    %2154 = vmatprep.subr.bf16.mxu0 0
    %2155 = vmatpush2.bf16.msra.mxu0 %v2112
    %2156 = vmatprep.subr.bf16.mxu0 0
    %2157 = vmatpush2.bf16.msra.mxu0 %v2111
    %2158 = vmatprep.subr.bf16.mxu0 0
    %2159 = vmatpush2.bf16.msra.mxu0 %v2110
    %2160 = vmatprep.subr.bf16.mxu0 0
    %2161 = vmatpush2.bf16.msra.mxu0 %v2109
    %2162 = vmatprep.subr.bf16.mxu0 0
    %2163 = vmatpush2.bf16.msra.mxu0 %v2108
    %2164 = vmatprep.mubr.bf16.mxu0 %v1993
    %2165 = vmatmul.mubr.bf16.gmra.mxu0 %v1709
    %v2166 = vpop.f32.mrf.mxu0
    %v2167 = vadd.f32 %v2034, %v2166
    %v2168 = vpop.f32.mrf.mxu0
    %v2169 = vpop.f32.mrf.mxu0
    %v2170 = vadd.f32 %v2034, %v2169
    %v2171 = vpop.f32.mrf.mxu0
    %2172 = vmatprep.mubr.bf16.mxu0 %v1994
    %2173 = vmatmul.mubr.bf16.gmra.mxu0 %v1710
    %v2174 = vpop.f32.mrf.mxu0
    %v2175 = vadd.f32 %v2034, %v2174
    %v2176 = vpop.f32.mrf.mxu0
    %v2177 = vpop.f32.mrf.mxu0
    %v2178 = vadd.f32 %v2034, %v2177
    %v2179 = vpop.f32.mrf.mxu0
    %2180 = vmatprep.mubr.bf16.mxu0 %v1995
    %2181 = vmatmul.mubr.bf16.gmra.mxu0 %v1711
    %v2182 = vpop.f32.mrf.mxu0
    %v2183 = vadd.f32 %v2034, %v2182
    %v2184 = vpop.f32.mrf.mxu0
    %v2185 = vpop.f32.mrf.mxu0
    %v2186 = vadd.f32 %v2034, %v2185
    %v2187 = vpop.f32.mrf.mxu0
    %2188 = vmatprep.mubr.bf16.mxu0 %v1996
    %2189 = vmatmul.mubr.bf16.gmra.mxu0 %v1712
    %v2190 = vpop.f32.mrf.mxu0
    %v2191 = vadd.f32 %v2034, %v2190
    %v2192 = vpop.f32.mrf.mxu0
    %v2193 = vpop.f32.mrf.mxu0
    %v2194 = vadd.f32 %v2034, %v2193
    %v2195 = vpop.f32.mrf.mxu0
    %2196 = vdwg.mxu0
    %v2197 = vtanh.pop %v2167
    %v2198 = vtanh.pop %v2170
    %v2199 = vtanh.pop %v2175
    %v2200 = vtanh.pop %v2178
    %v2201 = vtanh.pop %v2183
    %v2202 = vtanh.pop %v2186
    %v2203 = vtanh.pop %v2191
    %v2204 = vtanh.pop %v2194
    %v2205 = vpack.c.bf16 %v2198, %v2197
    %v2206 = vpack.c.bf16 %v2200, %v2199
    %v2207 = vpack.c.bf16 %v2202, %v2201
    %v2208 = vpack.c.bf16 %v2204, %v2203
    %v2213 = vunpack.c.l.b16 %v2205
    %v2214 = vunpack.c.h.b16 %v2205
    %v2215 = vunpack.c.l.b16 %v2206
    %v2216 = vunpack.c.h.b16 %v2206
    %v2217 = vunpack.c.l.b16 %v2207
    %v2218 = vunpack.c.h.b16 %v2207
    %v2219 = vunpack.c.l.b16 %v2208
    %v2220 = vunpack.c.h.b16 %v2208
    %v2221 = vpack.c.b16 %v2213, %v2213
    %v2222 = vpack.c.b16 %v2214, %v2214
    %v2223 = vpack.c.b16 %v2215, %v2215
    %v2224 = vpack.c.b16 %v2216, %v2216
    %v2225 = vpack.c.b16 %v2217, %v2217
    %v2226 = vpack.c.b16 %v2218, %v2218
    %v2227 = vpack.c.b16 %v2219, %v2219
    %v2228 = vpack.c.b16 %v2220, %v2220
    %2237 = vst [vmem:[%s13] sm:$0xf] %v2221
    %2238 = vst [vmem:[%s13 + $0x4] sm:$0xf] %v2222
    %2239 = vst [vmem:[%s13 + $0x8] sm:$0xf] %v2223
    %2240 = vst [vmem:[%s13 + $0xc] sm:$0xf] %v2224
    %2241 = vst [vmem:[%s13 + $0x10] sm:$0xf] %v2225
    %2242 = vst [vmem:[%s13 + $0x14] sm:$0xf] %v2226
    %2243 = vst [vmem:[%s13 + $0x18] sm:$0xf] %v2227
    %2244 = vst [vmem:[%s13 + $0x1c] sm:$0xf] %v2228
    %2245 = vst [vmem:[%s14] sm:$0xff] %v1883
    %2246 = vst [vmem:[%s14 + $0x8] sm:$0xff] %v1884
    %2247 = vst [vmem:[%s14 + $0x10] sm:$0xff] %v1885
    %2248 = vst [vmem:[%s14 + $0x18] sm:$0xff] %v1886
    %2249 = vst [vmem:[%s14 + $0x20] sm:$0xff] %v1887
    %2250 = vst [vmem:[%s14 + $0x28] sm:$0xff] %v1888
    %2251 = vst [vmem:[%s14 + $0x30] sm:$0xff] %v1889
    %2252 = vst [vmem:[%s14 + $0x38] sm:$0xff] %v1890
    // Predicated region
    $region62: #{nmt_plan_model_forward.1} parent=1 // pred_check
      _
    $region63: #{nmt_plan_model_forward.1} parent=1 // pred_check_branch
      %2254 = sbr.rel (0) target = $region65
    $region64: #{nmt_plan_model_forward.1} parent=1 // pred_region
      _
    $region65: #{nmt_plan_model_forward.1} parent=1 // pred_fallthru
      _
    // Predicated region
    $region66: #{nmt_plan_model_forward.1} parent=1 // pred_check
      _
    $region67: #{nmt_plan_model_forward.1} parent=1 // pred_check_branch
      %2256 = sbr.rel (0) target = $region69
    $region68: #{nmt_plan_model_forward.1} parent=1 // pred_region
      _
    $region69: #{nmt_plan_model_forward.1} parent=1 // pred_fallthru
      _
    // Predicated region
    $region70: #{nmt_plan_model_forward.1} parent=1 // pred_check
      _
    $region71: #{nmt_plan_model_forward.1} parent=1 // pred_check_branch
      %2258 = sbr.rel (0) target = $region73
    $region72: #{nmt_plan_model_forward.1} parent=1 // pred_region
      _
    $region73: #{nmt_plan_model_forward.1} parent=1 // pred_fallthru
      _
    // Predicated region
    $region74: #{nmt_plan_model_forward.1} parent=1 // pred_check
      _
    $region75: #{nmt_plan_model_forward.1} parent=1 // pred_check_branch
      %2260 = sbr.rel (0) target = $region77
    $region76: #{nmt_plan_model_forward.1} parent=1 // pred_region
      _
    $region77: #{nmt_plan_model_forward.1} parent=1 // pred_fallthru
      _
    // Predicated region
    $region78: #{nmt_plan_model_forward.1} parent=1 // pred_check
      _
    $region79: #{nmt_plan_model_forward.1} parent=1 // pred_check_branch
      %2262 = sbr.rel (0) target = $region81
    $region80: #{nmt_plan_model_forward.1} parent=1 // pred_region
      _
    $region81: #{nmt_plan_model_forward.1} parent=1 // pred_fallthru
      _
    // Predicated region
    $region82: #{nmt_plan_model_forward.1} parent=1 // pred_check
      _
    $region83: #{nmt_plan_model_forward.1} parent=1 // pred_check_branch
      %2264 = sbr.rel (0) target = $region85
    $region84: #{nmt_plan_model_forward.1} parent=1 // pred_region
      _
    $region85: #{nmt_plan_model_forward.1} parent=1 // pred_fallthru
      _
    // Predicated region
    $region86: #{nmt_plan_model_forward.1} parent=1 // pred_check
      _
    $region87: #{nmt_plan_model_forward.1} parent=1 // pred_check_branch
      %2266 = sbr.rel (0) target = $region89
    $region88: #{nmt_plan_model_forward.1} parent=1 // pred_region
      _
    $region89: #{nmt_plan_model_forward.1} parent=1 // pred_fallthru
      _
    // Predicated region
    $region90: #{nmt_plan_model_forward.1} parent=1 // pred_check
      _
    $region91: #{nmt_plan_model_forward.1} parent=1 // pred_check_branch
      %2268 = sbr.rel (0) target = $region93
    $region92: #{nmt_plan_model_forward.1} parent=1 // pred_region
      _
    $region93: #{nmt_plan_model_forward.1} parent=1 // pred_fallthru
      _
    %2269 = vsyncpa [#allocation3], 1
    %2270 = vsyncpa [#allocation5], 1

</llo_original>
